<compile_context>
chip_gen: v6e
topology: v6e:2x2x1
jax: 0.10.0
libtpu: 0.0.40
codegen_flags: <defaults>
</compile_context>

<pallas_src>
import functools
import math

import jax
import jax.numpy as jnp
from jax.experimental import pallas as pl
from jax.experimental.pallas import tpu as pltpu


def _round_up(x, m):
    return ((x + m - 1) // m) * m


def _nfa_kernel(x_ref, w_ref, p_ref, mask_ref, o_ref,
                y_acc, s1_ref, ss1_ref,
                *, B, C, H, W, Wp, lout, base, bn_eps, sig_eps):
    # x_ref    : (1, C, win)    zero-padded image, padded frame flattened on lanes
    # w_ref    : (C, C*9)       conv weight, columns ordered (ci, kh, kw)
    # p_ref    : (C, 4)         packed BN params [gamma1, beta1, gamma2, beta2]
    # mask_ref : (1, B*lout)    1.0 on valid pixels, 0.0 on pad ("junk") lanes
    # o_ref    : (1, B*lout)    significance score, lane-dense
    # y_acc    : (C, B*lout)    conv activations for the whole batch (VMEM scratch)
    # s1 / ss1 : (C, 1)         bn1 sum / sum-of-squares accumulators
    b = pl.program_id(0)

    @pl.when(b == 0)
    def _init():
        s1_ref[...] = jnp.zeros_like(s1_ref)
        ss1_ref[...] = jnp.zeros_like(ss1_ref)

    # ---- 3x3 conv for this batch element ------------------------------------
    # Each tap (kh, kw) is a constant lane shift of the flattened padded frame.
    # C is small, so do C*9 broadcast (outer-product) FMAs on the VPU instead
    # of an almost-empty MXU matmul.  Weight is loaded once per step.
    wmat = w_ref[...]                                        # (C, C*9)
    acc = None
    for kh in range(3):
        for kw in range(3):
            off = base + (kh - 1) * Wp + (kw - 1)            # static shift
            tap = x_ref[0, :, off:off + lout]                # (C, lout)
            for ci in range(C):
                j = ci * 9 + kh * 3 + kw
                wcol = wmat[:, j:j + 1]                      # (C, 1)
                term = wcol * tap[ci:ci + 1, :]              # (C,1)*(1,lout)->(C,lout)
                acc = term if acc is None else acc + term
    yb = acc                                                 # (C, lout) float32
    # conv bias omitted: the training-mode BN below subtracts the per-channel
    # batch mean, which cancels a per-channel bias exactly.

    # ---- stash activations + accumulate bn1 statistics (single pass) --------
    coff = pl.multiple_of(b * lout, 128)
    y_acc[:, pl.ds(coff, lout)] = yb
    mb = mask_ref[:, 0:lout]                                 # per-image validity mask
    ym = yb * mb
    s1_ref[...] += jnp.sum(ym, axis=1, keepdims=True)
    ss1_ref[...] += jnp.sum(ym * ym, axis=1, keepdims=True)

    # ---- finalize on the last batch element ----------------------------------
    @pl.when(b == pl.num_programs(0) - 1)
    def _finalize():
        inv_cnt = 1.0 / float(B * H * W)
        g1, be1 = p_ref[:, 0:1], p_ref[:, 1:2]
        g2, be2 = p_ref[:, 2:3], p_ref[:, 3:4]
        mask = mask_ref[...]                                 # (1, B*lout)

        # bn1 (batch stats, biased var) + relu, one fused pass over (C, B*lout)
        mean1 = s1_ref[...] * inv_cnt
        var1 = ss1_ref[...] * inv_cnt - mean1 * mean1
        sc1 = g1 * jax.lax.rsqrt(var1 + bn_eps)
        sh1 = be1 - mean1 * sc1
        h = jnp.maximum(y_acc[...] * sc1 + sh1, 0.0)         # (C, B*lout)

        # bn2 stats in one masked pass (junk pad lanes excluded), then bn2+relu
        hm = h * mask
        mean2 = jnp.sum(hm, axis=1, keepdims=True) * inv_cnt
        var2 = jnp.sum(hm * hm, axis=1, keepdims=True) * inv_cnt - mean2 * mean2
        sc2 = g2 * jax.lax.rsqrt(var2 + bn_eps)
        sh2 = be2 - mean2 * sc2
        h2 = jnp.maximum(h * sc2 + sh2, 0.0)

        # NFA significance score per pixel (lane-dense output row)
        a = C / 2.0
        s = jnp.sum(h2 * h2, axis=0, keepdims=True) * 0.5    # (1, B*lout)
        lg = ((a - 1.0) * jnp.log(s + sig_eps) - s
              + jnp.log(1.0 + (a - 1.0) / (s + sig_eps)
                        + (a - 1.0) * (a - 2.0) / (s * s + sig_eps)))
        o_ref[...] = jnp.maximum(math.lgamma(a) - math.log(float(H * W)) - lg, 0.0)


def spatial_nfa_block(x, conv_w, conv_b, g1, b1, g2, b2):
    """x: (B, C, H, W) float32.  Returns (B, H, W) float32 significance map."""
    del conv_b  # cancelled exactly by the training-mode BN mean subtraction
    B, C, H, W = x.shape
    Hp, Wp = H + 2, W + 2
    base = Wp + 1                                  # flat index of output pixel (0, 0)
    lout = _round_up(H * Wp, 128)                  # lane-dense per-image output width
    win = _round_up(base + Wp + 1 + lout, 128)     # input width incl. max tap shift

    # pad=1 zero padding, then flatten the padded frame onto the lane axis.
    xpad = jnp.pad(x.astype(jnp.float32), ((0, 0), (0, 0), (1, 1), (1, 1)))
    xflat = xpad.reshape(B, C, Hp * Wp)
    xflat = jnp.pad(xflat, ((0, 0), (0, 0), (0, win - Hp * Wp)))       # (B, C, win)

    w_v = conv_w.reshape(C, C * 9).astype(jnp.float32)                 # (co, ci*9+kh*3+kw)
    params = jnp.stack([g1, b1, g2, b2], axis=1).astype(jnp.float32)   # (C, 4)

    jj = jnp.arange(lout)
    maskb = ((jj < H * Wp) & (jj % Wp < W)).astype(jnp.float32)        # valid-pixel mask
    mask = jnp.tile(maskb, B)[None, :]                                 # (1, B*lout)

    kernel = functools.partial(_nfa_kernel, B=B, C=C, H=H, W=W, Wp=Wp,
                               lout=lout, base=base, bn_eps=1e-5, sig_eps=1e-8)
    out = pl.pallas_call(
        kernel,
        out_shape=jax.ShapeDtypeStruct((1, B * lout), jnp.float32),
        grid_spec=pltpu.PrefetchScalarGridSpec(
            num_scalar_prefetch=0,
            grid=(B,),                                   # one step per batch element
            in_specs=[
                pl.BlockSpec((1, C, win), lambda b: (b, 0, 0)),
                pl.BlockSpec((C, C * 9), lambda b: (0, 0)),
                pl.BlockSpec((C, 4), lambda b: (0, 0)),
                pl.BlockSpec((1, B * lout), lambda b: (0, 0)),
            ],
            out_specs=pl.BlockSpec((1, B * lout), lambda b: (0, 0)),
            scratch_shapes=[
                pltpu.VMEM((C, B * lout), jnp.float32),  # conv activations (whole batch)
                pltpu.VMEM((C, 1), jnp.float32),         # bn1 sum accumulator
                pltpu.VMEM((C, 1), jnp.float32),         # bn1 sum-of-squares accumulator
            ],
        ),
        # The batch axis carries the BN accumulation + resident output -> arbitrary.
        compiler_params=pltpu.CompilerParams(dimension_semantics=("arbitrary",)),
    )(xflat, w_v, params, mask)

    # drop the per-row pad lanes and reshape back to (B, H, W)
    out = out.reshape(B, lout)[:, :H * Wp].reshape(B, H, Wp)[:, :, :W]
    return out
    # TODO(synk): for large H*W, additionally tile the spatial axis (halo tap
    # reads + a second normalization pass over an HBM-resident conv output) and
    # mark that axis "parallel" for v7x's two TensorCores.


def _reference_forward(x, conv_w, conv_b, g1, b1, g2, b2):
    """Pure-JAX reference mirroring the PyTorch module (training-mode BN)."""
    y = jax.lax.conv_general_dilated(
        x, conv_w, window_strides=(1, 1), padding="SAME",
        dimension_numbers=("NCHW", "OIHW", "NCHW"))
    y = y + conv_b[None, :, None, None]

    def bn(z, g, bb):
        m = jnp.mean(z, axis=(0, 2, 3), keepdims=True)
        v = jnp.mean((z - m) ** 2, axis=(0, 2, 3), keepdims=True)
        return g[None, :, None, None] * (z - m) / jnp.sqrt(v + 1e-5) \
            + bb[None, :, None, None]

    y = jnp.maximum(bn(y, g1, b1), 0.0)
    y = jnp.maximum(bn(y, g2, b2), 0.0)

    C = x.shape[1]
    n_pixels = x.shape[2] * x.shape[3]
    a = C / 2.0
    s = jnp.sum(y * y, axis=1) / 2.0
    lg = ((a - 1.0) * jnp.log(s + 1e-8) - s
          + jnp.log(1.0 + (a - 1.0) / (s + 1e-8)
                    + (a - 1.0) * (a - 2.0) / (s * s + 1e-8)))
    return jnp.maximum(math.lgamma(a) - math.log(n_pixels) - lg, 0.0)


if __name__ == "__main__":
    B, C, H, W = 2, 4, 16, 16

    key = jax.random.PRNGKey(0)
    kx, kw, kb, kg1, kb1, kg2, kb2 = jax.random.split(key, 7)
    x = jax.random.normal(kx, (B, C, H, W), dtype=jnp.float32)
    conv_w = 0.3 * jax.random.normal(kw, (C, C, 3, 3), dtype=jnp.float32)
    conv_b = 0.1 * jax.random.normal(kb, (C,), dtype=jnp.float32)
    g1 = 1.0 + 0.2 * jax.random.normal(kg1, (C,), dtype=jnp.float32)
    b1 = 0.1 * jax.random.normal(kb1, (C,), dtype=jnp.float32)
    g2 = 1.0 + 0.2 * jax.random.normal(kg2, (C,), dtype=jnp.float32)
    b2 = 0.1 * jax.random.normal(kb2, (C,), dtype=jnp.float32)

    out = spatial_nfa_block(x, conv_w, conv_b, g1, b1, g2, b2)
    out = jax.block_until_ready(out)

    ref = jax.block_until_ready(_reference_forward(x, conv_w, conv_b, g1, b1, g2, b2))
    assert out.shape == (B, H, W)
    max_err = float(jnp.max(jnp.abs(out - ref)))
    assert max_err < 1e-3, f"mismatch vs reference: {max_err}"

    print("KERNEL_OK")
</pallas_src>

<mosaic_0001>
module attributes {stable_mosaic.version = 11 : i64} {
  func.func @_nfa_kernel(%arg0: i32, %arg1: memref<1x4x512xf32, #tpu.memory_space<vmem>>, %arg2: memref<4x36xf32, #tpu.memory_space<vmem>>, %arg3: memref<4x4xf32, #tpu.memory_space<vmem>>, %arg4: memref<1x768xf32, #tpu.memory_space<vmem>>, %arg5: memref<1x768xf32, #tpu.memory_space<vmem>>, %arg6: memref<4x768xf32, #tpu.memory_space<vmem>>, %arg7: memref<4x1xf32, #tpu.memory_space<vmem>>, %arg8: memref<4x1xf32, #tpu.memory_space<vmem>>) attributes {dimension_semantics = [#tpu.dimension_semantics<arbitrary>], iteration_bounds = array<i64: 2>, scalar_prefetch = 0 : i64, scratch_operands = 3 : i64, tpu.core_type = #tpu.core_type<tc>, window_params = [{transform_indices = @transform_0, window_bounds = array<i64: 1, 4, 512>}, {pipeline_mode = #tpu.pipeline_mode<synchronous>, transform_indices = @transform_1, window_bounds = array<i64: 4, 36>}, {pipeline_mode = #tpu.pipeline_mode<synchronous>, transform_indices = @transform_2, window_bounds = array<i64: 4, 4>}, {pipeline_mode = #tpu.pipeline_mode<synchronous>, transform_indices = @transform_3, window_bounds = array<i64: 1, 768>}, {pipeline_mode = #tpu.pipeline_mode<synchronous>, transform_indices = @transform_4, window_bounds = array<i64: 1, 768>}]} {
    %c0_i32 = arith.constant 0 : i32
    %0 = arith.cmpi eq, %arg0, %c0_i32 : i32
    %1 = arith.extui %0 : i1 to i32
    %c0_i32_0 = arith.constant 0 : i32
    %2 = arith.cmpi ne, %1, %c0_i32_0 : i32
    scf.if %2 {
      %cst_34 = arith.constant 0.000000e+00 : f32
      %258 = vector.broadcast %cst_34 : f32 to vector<4x1xf32>
      %c0_35 = arith.constant 0 : index
      %c0_36 = arith.constant 0 : index
      %259 = vector.load %arg7[%c0_35, %c0_36] : memref<4x1xf32, #tpu.memory_space<vmem>>, vector<4x1xf32>
      tpu.vector_store %arg7[%c0_35, %c0_36], %258 {strides = array<i32>} : memref<4x1xf32, #tpu.memory_space<vmem>>, vector<4x1xf32>,
      %cst_37 = arith.constant 0.000000e+00 : f32
      %260 = vector.broadcast %cst_37 : f32 to vector<4x1xf32>
      %c0_38 = arith.constant 0 : index
      %c0_39 = arith.constant 0 : index
      %261 = vector.load %arg8[%c0_38, %c0_39] : memref<4x1xf32, #tpu.memory_space<vmem>>, vector<4x1xf32>
      tpu.vector_store %arg8[%c0_38, %c0_39], %260 {strides = array<i32>} : memref<4x1xf32, #tpu.memory_space<vmem>>, vector<4x1xf32>,
    } else {
    }
    %c0 = arith.constant 0 : index
    %c0_1 = arith.constant 0 : index
    %3 = vector.load %arg2[%c0, %c0_1] : memref<4x36xf32, #tpu.memory_space<vmem>>, vector<4x36xf32>
    %c0_2 = arith.constant 0 : index
    %c0_3 = arith.constant 0 : index
    %c0_4 = arith.constant 0 : index
    %4 = vector.load %arg1[%c0_2, %c0_3, %c0_4] : memref<1x4x512xf32, #tpu.memory_space<vmem>>, vector<1x4x384xf32>
    %5 = vector.shape_cast %4 : vector<1x4x384xf32> to vector<4x384xf32>
    %6 = vector.extract_strided_slice %3 {offsets = [0, 0], sizes = [4, 1], strides = [1, 1]} : vector<4x36xf32> to vector<4x1xf32>
    %7 = vector.extract_strided_slice %5 {offsets = [0, 0], sizes = [1, 384], strides = [1, 1]} : vector<4x384xf32> to vector<1x384xf32>
    %8 = vector.broadcast %6 : vector<4x1xf32> to vector<4x384xf32>
    %9 = vector.broadcast %7 : vector<1x384xf32> to vector<4x384xf32>
    %10 = arith.mulf %8, %9 : vector<4x384xf32>
    %11 = vector.extract_strided_slice %3 {offsets = [0, 9], sizes = [4, 1], strides = [1, 1]} : vector<4x36xf32> to vector<4x1xf32>
    %12 = vector.extract_strided_slice %5 {offsets = [1, 0], sizes = [1, 384], strides = [1, 1]} : vector<4x384xf32> to vector<1x384xf32>
    %13 = vector.broadcast %11 : vector<4x1xf32> to vector<4x384xf32>
    %14 = vector.broadcast %12 : vector<1x384xf32> to vector<4x384xf32>
    %15 = arith.mulf %13, %14 : vector<4x384xf32>
    %16 = arith.addf %10, %15 : vector<4x384xf32>
    %17 = vector.extract_strided_slice %3 {offsets = [0, 18], sizes = [4, 1], strides = [1, 1]} : vector<4x36xf32> to vector<4x1xf32>
    %18 = vector.extract_strided_slice %5 {offsets = [2, 0], sizes = [1, 384], strides = [1, 1]} : vector<4x384xf32> to vector<1x384xf32>
    %19 = vector.broadcast %17 : vector<4x1xf32> to vector<4x384xf32>
    %20 = vector.broadcast %18 : vector<1x384xf32> to vector<4x384xf32>
    %21 = arith.mulf %19, %20 : vector<4x384xf32>
    %22 = arith.addf %16, %21 : vector<4x384xf32>
    %23 = vector.extract_strided_slice %3 {offsets = [0, 27], sizes = [4, 1], strides = [1, 1]} : vector<4x36xf32> to vector<4x1xf32>
    %24 = vector.extract_strided_slice %5 {offsets = [3, 0], sizes = [1, 384], strides = [1, 1]} : vector<4x384xf32> to vector<1x384xf32>
    %25 = vector.broadcast %23 : vector<4x1xf32> to vector<4x384xf32>
    %26 = vector.broadcast %24 : vector<1x384xf32> to vector<4x384xf32>
    %27 = arith.mulf %25, %26 : vector<4x384xf32>
    %28 = arith.addf %22, %27 : vector<4x384xf32>
    %c0_5 = arith.constant 0 : index
    %c0_6 = arith.constant 0 : index
    %c1 = arith.constant 1 : index
    %29 = vector.load %arg1[%c0_5, %c0_6, %c1] : memref<1x4x512xf32, #tpu.memory_space<vmem>>, vector<1x4x384xf32>
    %30 = vector.shape_cast %29 : vector<1x4x384xf32> to vector<4x384xf32>
    %31 = vector.extract_strided_slice %3 {offsets = [0, 1], sizes = [4, 1], strides = [1, 1]} : vector<4x36xf32> to vector<4x1xf32>
    %32 = vector.extract_strided_slice %30 {offsets = [0, 0], sizes = [1, 384], strides = [1, 1]} : vector<4x384xf32> to vector<1x384xf32>
    %33 = vector.broadcast %31 : vector<4x1xf32> to vector<4x384xf32>
    %34 = vector.broadcast %32 : vector<1x384xf32> to vector<4x384xf32>
    %35 = arith.mulf %33, %34 : vector<4x384xf32>
    %36 = arith.addf %28, %35 : vector<4x384xf32>
    %37 = vector.extract_strided_slice %3 {offsets = [0, 10], sizes = [4, 1], strides = [1, 1]} : vector<4x36xf32> to vector<4x1xf32>
    %38 = vector.extract_strided_slice %30 {offsets = [1, 0], sizes = [1, 384], strides = [1, 1]} : vector<4x384xf32> to vector<1x384xf32>
    %39 = vector.broadcast %37 : vector<4x1xf32> to vector<4x384xf32>
    %40 = vector.broadcast %38 : vector<1x384xf32> to vector<4x384xf32>
    %41 = arith.mulf %39, %40 : vector<4x384xf32>
    %42 = arith.addf %36, %41 : vector<4x384xf32>
    %43 = vector.extract_strided_slice %3 {offsets = [0, 19], sizes = [4, 1], strides = [1, 1]} : vector<4x36xf32> to vector<4x1xf32>
    %44 = vector.extract_strided_slice %30 {offsets = [2, 0], sizes = [1, 384], strides = [1, 1]} : vector<4x384xf32> to vector<1x384xf32>
    %45 = vector.broadcast %43 : vector<4x1xf32> to vector<4x384xf32>
    %46 = vector.broadcast %44 : vector<1x384xf32> to vector<4x384xf32>
    %47 = arith.mulf %45, %46 : vector<4x384xf32>
    %48 = arith.addf %42, %47 : vector<4x384xf32>
    %49 = vector.extract_strided_slice %3 {offsets = [0, 28], sizes = [4, 1], strides = [1, 1]} : vector<4x36xf32> to vector<4x1xf32>
    %50 = vector.extract_strided_slice %30 {offsets = [3, 0], sizes = [1, 384], strides = [1, 1]} : vector<4x384xf32> to vector<1x384xf32>
    %51 = vector.broadcast %49 : vector<4x1xf32> to vector<4x384xf32>
    %52 = vector.broadcast %50 : vector<1x384xf32> to vector<4x384xf32>
    %53 = arith.mulf %51, %52 : vector<4x384xf32>
    %54 = arith.addf %48, %53 : vector<4x384xf32>
    %c0_7 = arith.constant 0 : index
    %c0_8 = arith.constant 0 : index
    %c2 = arith.constant 2 : index
    %55 = vector.load %arg1[%c0_7, %c0_8, %c2] : memref<1x4x512xf32, #tpu.memory_space<vmem>>, vector<1x4x384xf32>
    %56 = vector.shape_cast %55 : vector<1x4x384xf32> to vector<4x384xf32>
    %57 = vector.extract_strided_slice %3 {offsets = [0, 2], sizes = [4, 1], strides = [1, 1]} : vector<4x36xf32> to vector<4x1xf32>
    %58 = vector.extract_strided_slice %56 {offsets = [0, 0], sizes = [1, 384], strides = [1, 1]} : vector<4x384xf32> to vector<1x384xf32>
    %59 = vector.broadcast %57 : vector<4x1xf32> to vector<4x384xf32>
    %60 = vector.broadcast %58 : vector<1x384xf32> to vector<4x384xf32>
    %61 = arith.mulf %59, %60 : vector<4x384xf32>
    %62 = arith.addf %54, %61 : vector<4x384xf32>
    %63 = vector.extract_strided_slice %3 {offsets = [0, 11], sizes = [4, 1], strides = [1, 1]} : vector<4x36xf32> to vector<4x1xf32>
    %64 = vector.extract_strided_slice %56 {offsets = [1, 0], sizes = [1, 384], strides = [1, 1]} : vector<4x384xf32> to vector<1x384xf32>
    %65 = vector.broadcast %63 : vector<4x1xf32> to vector<4x384xf32>
    %66 = vector.broadcast %64 : vector<1x384xf32> to vector<4x384xf32>
    %67 = arith.mulf %65, %66 : vector<4x384xf32>
    %68 = arith.addf %62, %67 : vector<4x384xf32>
    %69 = vector.extract_strided_slice %3 {offsets = [0, 20], sizes = [4, 1], strides = [1, 1]} : vector<4x36xf32> to vector<4x1xf32>
    %70 = vector.extract_strided_slice %56 {offsets = [2, 0], sizes = [1, 384], strides = [1, 1]} : vector<4x384xf32> to vector<1x384xf32>
    %71 = vector.broadcast %69 : vector<4x1xf32> to vector<4x384xf32>
    %72 = vector.broadcast %70 : vector<1x384xf32> to vector<4x384xf32>
    %73 = arith.mulf %71, %72 : vector<4x384xf32>
    %74 = arith.addf %68, %73 : vector<4x384xf32>
    %75 = vector.extract_strided_slice %3 {offsets = [0, 29], sizes = [4, 1], strides = [1, 1]} : vector<4x36xf32> to vector<4x1xf32>
    %76 = vector.extract_strided_slice %56 {offsets = [3, 0], sizes = [1, 384], strides = [1, 1]} : vector<4x384xf32> to vector<1x384xf32>
    %77 = vector.broadcast %75 : vector<4x1xf32> to vector<4x384xf32>
    %78 = vector.broadcast %76 : vector<1x384xf32> to vector<4x384xf32>
    %79 = arith.mulf %77, %78 : vector<4x384xf32>
    %80 = arith.addf %74, %79 : vector<4x384xf32>
    %c0_9 = arith.constant 0 : index
    %c0_10 = arith.constant 0 : index
    %c18 = arith.constant 18 : index
    %81 = vector.load %arg1[%c0_9, %c0_10, %c18] : memref<1x4x512xf32, #tpu.memory_space<vmem>>, vector<1x4x384xf32>
    %82 = vector.shape_cast %81 : vector<1x4x384xf32> to vector<4x384xf32>
    %83 = vector.extract_strided_slice %3 {offsets = [0, 3], sizes = [4, 1], strides = [1, 1]} : vector<4x36xf32> to vector<4x1xf32>
    %84 = vector.extract_strided_slice %82 {offsets = [0, 0], sizes = [1, 384], strides = [1, 1]} : vector<4x384xf32> to vector<1x384xf32>
    %85 = vector.broadcast %83 : vector<4x1xf32> to vector<4x384xf32>
    %86 = vector.broadcast %84 : vector<1x384xf32> to vector<4x384xf32>
    %87 = arith.mulf %85, %86 : vector<4x384xf32>
    %88 = arith.addf %80, %87 : vector<4x384xf32>
    %89 = vector.extract_strided_slice %3 {offsets = [0, 12], sizes = [4, 1], strides = [1, 1]} : vector<4x36xf32> to vector<4x1xf32>
    %90 = vector.extract_strided_slice %82 {offsets = [1, 0], sizes = [1, 384], strides = [1, 1]} : vector<4x384xf32> to vector<1x384xf32>
    %91 = vector.broadcast %89 : vector<4x1xf32> to vector<4x384xf32>
    %92 = vector.broadcast %90 : vector<1x384xf32> to vector<4x384xf32>
    %93 = arith.mulf %91, %92 : vector<4x384xf32>
    %94 = arith.addf %88, %93 : vector<4x384xf32>
    %95 = vector.extract_strided_slice %3 {offsets = [0, 21], sizes = [4, 1], strides = [1, 1]} : vector<4x36xf32> to vector<4x1xf32>
    %96 = vector.extract_strided_slice %82 {offsets = [2, 0], sizes = [1, 384], strides = [1, 1]} : vector<4x384xf32> to vector<1x384xf32>
    %97 = vector.broadcast %95 : vector<4x1xf32> to vector<4x384xf32>
    %98 = vector.broadcast %96 : vector<1x384xf32> to vector<4x384xf32>
    %99 = arith.mulf %97, %98 : vector<4x384xf32>
    %100 = arith.addf %94, %99 : vector<4x384xf32>
    %101 = vector.extract_strided_slice %3 {offsets = [0, 30], sizes = [4, 1], strides = [1, 1]} : vector<4x36xf32> to vector<4x1xf32>
    %102 = vector.extract_strided_slice %82 {offsets = [3, 0], sizes = [1, 384], strides = [1, 1]} : vector<4x384xf32> to vector<1x384xf32>
    %103 = vector.broadcast %101 : vector<4x1xf32> to vector<4x384xf32>
    %104 = vector.broadcast %102 : vector<1x384xf32> to vector<4x384xf32>
    %105 = arith.mulf %103, %104 : vector<4x384xf32>
    %106 = arith.addf %100, %105 : vector<4x384xf32>
    %c0_11 = arith.constant 0 : index
    %c0_12 = arith.constant 0 : index
    %c19 = arith.constant 19 : index
    %107 = vector.load %arg1[%c0_11, %c0_12, %c19] : memref<1x4x512xf32, #tpu.memory_space<vmem>>, vector<1x4x384xf32>
    %108 = vector.shape_cast %107 : vector<1x4x384xf32> to vector<4x384xf32>
    %109 = vector.extract_strided_slice %3 {offsets = [0, 4], sizes = [4, 1], strides = [1, 1]} : vector<4x36xf32> to vector<4x1xf32>
    %110 = vector.extract_strided_slice %108 {offsets = [0, 0], sizes = [1, 384], strides = [1, 1]} : vector<4x384xf32> to vector<1x384xf32>
    %111 = vector.broadcast %109 : vector<4x1xf32> to vector<4x384xf32>
    %112 = vector.broadcast %110 : vector<1x384xf32> to vector<4x384xf32>
    %113 = arith.mulf %111, %112 : vector<4x384xf32>
    %114 = arith.addf %106, %113 : vector<4x384xf32>
    %115 = vector.extract_strided_slice %3 {offsets = [0, 13], sizes = [4, 1], strides = [1, 1]} : vector<4x36xf32> to vector<4x1xf32>
    %116 = vector.extract_strided_slice %108 {offsets = [1, 0], sizes = [1, 384], strides = [1, 1]} : vector<4x384xf32> to vector<1x384xf32>
    %117 = vector.broadcast %115 : vector<4x1xf32> to vector<4x384xf32>
    %118 = vector.broadcast %116 : vector<1x384xf32> to vector<4x384xf32>
    %119 = arith.mulf %117, %118 : vector<4x384xf32>
    %120 = arith.addf %114, %119 : vector<4x384xf32>
    %121 = vector.extract_strided_slice %3 {offsets = [0, 22], sizes = [4, 1], strides = [1, 1]} : vector<4x36xf32> to vector<4x1xf32>
    %122 = vector.extract_strided_slice %108 {offsets = [2, 0], sizes = [1, 384], strides = [1, 1]} : vector<4x384xf32> to vector<1x384xf32>
    %123 = vector.broadcast %121 : vector<4x1xf32> to vector<4x384xf32>
    %124 = vector.broadcast %122 : vector<1x384xf32> to vector<4x384xf32>
    %125 = arith.mulf %123, %124 : vector<4x384xf32>
    %126 = arith.addf %120, %125 : vector<4x384xf32>
    %127 = vector.extract_strided_slice %3 {offsets = [0, 31], sizes = [4, 1], strides = [1, 1]} : vector<4x36xf32> to vector<4x1xf32>
    %128 = vector.extract_strided_slice %108 {offsets = [3, 0], sizes = [1, 384], strides = [1, 1]} : vector<4x384xf32> to vector<1x384xf32>
    %129 = vector.broadcast %127 : vector<4x1xf32> to vector<4x384xf32>
    %130 = vector.broadcast %128 : vector<1x384xf32> to vector<4x384xf32>
    %131 = arith.mulf %129, %130 : vector<4x384xf32>
    %132 = arith.addf %126, %131 : vector<4x384xf32>
    %c0_13 = arith.constant 0 : index
    %c0_14 = arith.constant 0 : index
    %c20 = arith.constant 20 : index
    %133 = vector.load %arg1[%c0_13, %c0_14, %c20] : memref<1x4x512xf32, #tpu.memory_space<vmem>>, vector<1x4x384xf32>
    %134 = vector.shape_cast %133 : vector<1x4x384xf32> to vector<4x384xf32>
    %135 = vector.extract_strided_slice %3 {offsets = [0, 5], sizes = [4, 1], strides = [1, 1]} : vector<4x36xf32> to vector<4x1xf32>
    %136 = vector.extract_strided_slice %134 {offsets = [0, 0], sizes = [1, 384], strides = [1, 1]} : vector<4x384xf32> to vector<1x384xf32>
    %137 = vector.broadcast %135 : vector<4x1xf32> to vector<4x384xf32>
    %138 = vector.broadcast %136 : vector<1x384xf32> to vector<4x384xf32>
    %139 = arith.mulf %137, %138 : vector<4x384xf32>
    %140 = arith.addf %132, %139 : vector<4x384xf32>
    %141 = vector.extract_strided_slice %3 {offsets = [0, 14], sizes = [4, 1], strides = [1, 1]} : vector<4x36xf32> to vector<4x1xf32>
    %142 = vector.extract_strided_slice %134 {offsets = [1, 0], sizes = [1, 384], strides = [1, 1]} : vector<4x384xf32> to vector<1x384xf32>
    %143 = vector.broadcast %141 : vector<4x1xf32> to vector<4x384xf32>
    %144 = vector.broadcast %142 : vector<1x384xf32> to vector<4x384xf32>
    %145 = arith.mulf %143, %144 : vector<4x384xf32>
    %146 = arith.addf %140, %145 : vector<4x384xf32>
    %147 = vector.extract_strided_slice %3 {offsets = [0, 23], sizes = [4, 1], strides = [1, 1]} : vector<4x36xf32> to vector<4x1xf32>
    %148 = vector.extract_strided_slice %134 {offsets = [2, 0], sizes = [1, 384], strides = [1, 1]} : vector<4x384xf32> to vector<1x384xf32>
    %149 = vector.broadcast %147 : vector<4x1xf32> to vector<4x384xf32>
    %150 = vector.broadcast %148 : vector<1x384xf32> to vector<4x384xf32>
    %151 = arith.mulf %149, %150 : vector<4x384xf32>
    %152 = arith.addf %146, %151 : vector<4x384xf32>
    %153 = vector.extract_strided_slice %3 {offsets = [0, 32], sizes = [4, 1], strides = [1, 1]} : vector<4x36xf32> to vector<4x1xf32>
    %154 = vector.extract_strided_slice %134 {offsets = [3, 0], sizes = [1, 384], strides = [1, 1]} : vector<4x384xf32> to vector<1x384xf32>
    %155 = vector.broadcast %153 : vector<4x1xf32> to vector<4x384xf32>
    %156 = vector.broadcast %154 : vector<1x384xf32> to vector<4x384xf32>
    %157 = arith.mulf %155, %156 : vector<4x384xf32>
    %158 = arith.addf %152, %157 : vector<4x384xf32>
    %c0_15 = arith.constant 0 : index
    %c0_16 = arith.constant 0 : index
    %c36 = arith.constant 36 : index
    %159 = vector.load %arg1[%c0_15, %c0_16, %c36] : memref<1x4x512xf32, #tpu.memory_space<vmem>>, vector<1x4x384xf32>
    %160 = vector.shape_cast %159 : vector<1x4x384xf32> to vector<4x384xf32>
    %161 = vector.extract_strided_slice %3 {offsets = [0, 6], sizes = [4, 1], strides = [1, 1]} : vector<4x36xf32> to vector<4x1xf32>
    %162 = vector.extract_strided_slice %160 {offsets = [0, 0], sizes = [1, 384], strides = [1, 1]} : vector<4x384xf32> to vector<1x384xf32>
    %163 = vector.broadcast %161 : vector<4x1xf32> to vector<4x384xf32>
    %164 = vector.broadcast %162 : vector<1x384xf32> to vector<4x384xf32>
    %165 = arith.mulf %163, %164 : vector<4x384xf32>
    %166 = arith.addf %158, %165 : vector<4x384xf32>
    %167 = vector.extract_strided_slice %3 {offsets = [0, 15], sizes = [4, 1], strides = [1, 1]} : vector<4x36xf32> to vector<4x1xf32>
    %168 = vector.extract_strided_slice %160 {offsets = [1, 0], sizes = [1, 384], strides = [1, 1]} : vector<4x384xf32> to vector<1x384xf32>
    %169 = vector.broadcast %167 : vector<4x1xf32> to vector<4x384xf32>
    %170 = vector.broadcast %168 : vector<1x384xf32> to vector<4x384xf32>
    %171 = arith.mulf %169, %170 : vector<4x384xf32>
    %172 = arith.addf %166, %171 : vector<4x384xf32>
    %173 = vector.extract_strided_slice %3 {offsets = [0, 24], sizes = [4, 1], strides = [1, 1]} : vector<4x36xf32> to vector<4x1xf32>
    %174 = vector.extract_strided_slice %160 {offsets = [2, 0], sizes = [1, 384], strides = [1, 1]} : vector<4x384xf32> to vector<1x384xf32>
    %175 = vector.broadcast %173 : vector<4x1xf32> to vector<4x384xf32>
    %176 = vector.broadcast %174 : vector<1x384xf32> to vector<4x384xf32>
    %177 = arith.mulf %175, %176 : vector<4x384xf32>
    %178 = arith.addf %172, %177 : vector<4x384xf32>
    %179 = vector.extract_strided_slice %3 {offsets = [0, 33], sizes = [4, 1], strides = [1, 1]} : vector<4x36xf32> to vector<4x1xf32>
    %180 = vector.extract_strided_slice %160 {offsets = [3, 0], sizes = [1, 384], strides = [1, 1]} : vector<4x384xf32> to vector<1x384xf32>
    %181 = vector.broadcast %179 : vector<4x1xf32> to vector<4x384xf32>
    %182 = vector.broadcast %180 : vector<1x384xf32> to vector<4x384xf32>
    %183 = arith.mulf %181, %182 : vector<4x384xf32>
    %184 = arith.addf %178, %183 : vector<4x384xf32>
    %c0_17 = arith.constant 0 : index
    %c0_18 = arith.constant 0 : index
    %c37 = arith.constant 37 : index
    %185 = vector.load %arg1[%c0_17, %c0_18, %c37] : memref<1x4x512xf32, #tpu.memory_space<vmem>>, vector<1x4x384xf32>
    %186 = vector.shape_cast %185 : vector<1x4x384xf32> to vector<4x384xf32>
    %187 = vector.extract_strided_slice %3 {offsets = [0, 7], sizes = [4, 1], strides = [1, 1]} : vector<4x36xf32> to vector<4x1xf32>
    %188 = vector.extract_strided_slice %186 {offsets = [0, 0], sizes = [1, 384], strides = [1, 1]} : vector<4x384xf32> to vector<1x384xf32>
    %189 = vector.broadcast %187 : vector<4x1xf32> to vector<4x384xf32>
    %190 = vector.broadcast %188 : vector<1x384xf32> to vector<4x384xf32>
    %191 = arith.mulf %189, %190 : vector<4x384xf32>
    %192 = arith.addf %184, %191 : vector<4x384xf32>
    %193 = vector.extract_strided_slice %3 {offsets = [0, 16], sizes = [4, 1], strides = [1, 1]} : vector<4x36xf32> to vector<4x1xf32>
    %194 = vector.extract_strided_slice %186 {offsets = [1, 0], sizes = [1, 384], strides = [1, 1]} : vector<4x384xf32> to vector<1x384xf32>
    %195 = vector.broadcast %193 : vector<4x1xf32> to vector<4x384xf32>
    %196 = vector.broadcast %194 : vector<1x384xf32> to vector<4x384xf32>
    %197 = arith.mulf %195, %196 : vector<4x384xf32>
    %198 = arith.addf %192, %197 : vector<4x384xf32>
    %199 = vector.extract_strided_slice %3 {offsets = [0, 25], sizes = [4, 1], strides = [1, 1]} : vector<4x36xf32> to vector<4x1xf32>
    %200 = vector.extract_strided_slice %186 {offsets = [2, 0], sizes = [1, 384], strides = [1, 1]} : vector<4x384xf32> to vector<1x384xf32>
    %201 = vector.broadcast %199 : vector<4x1xf32> to vector<4x384xf32>
    %202 = vector.broadcast %200 : vector<1x384xf32> to vector<4x384xf32>
    %203 = arith.mulf %201, %202 : vector<4x384xf32>
    %204 = arith.addf %198, %203 : vector<4x384xf32>
    %205 = vector.extract_strided_slice %3 {offsets = [0, 34], sizes = [4, 1], strides = [1, 1]} : vector<4x36xf32> to vector<4x1xf32>
    %206 = vector.extract_strided_slice %186 {offsets = [3, 0], sizes = [1, 384], strides = [1, 1]} : vector<4x384xf32> to vector<1x384xf32>
    %207 = vector.broadcast %205 : vector<4x1xf32> to vector<4x384xf32>
    %208 = vector.broadcast %206 : vector<1x384xf32> to vector<4x384xf32>
    %209 = arith.mulf %207, %208 : vector<4x384xf32>
    %210 = arith.addf %204, %209 : vector<4x384xf32>
    %c0_19 = arith.constant 0 : index
    %c0_20 = arith.constant 0 : index
    %c38 = arith.constant 38 : index
    %211 = vector.load %arg1[%c0_19, %c0_20, %c38] : memref<1x4x512xf32, #tpu.memory_space<vmem>>, vector<1x4x384xf32>
    %212 = vector.shape_cast %211 : vector<1x4x384xf32> to vector<4x384xf32>
    %213 = vector.extract_strided_slice %3 {offsets = [0, 8], sizes = [4, 1], strides = [1, 1]} : vector<4x36xf32> to vector<4x1xf32>
    %214 = vector.extract_strided_slice %212 {offsets = [0, 0], sizes = [1, 384], strides = [1, 1]} : vector<4x384xf32> to vector<1x384xf32>
    %215 = vector.broadcast %213 : vector<4x1xf32> to vector<4x384xf32>
    %216 = vector.broadcast %214 : vector<1x384xf32> to vector<4x384xf32>
    %217 = arith.mulf %215, %216 : vector<4x384xf32>
    %218 = arith.addf %210, %217 : vector<4x384xf32>
    %219 = vector.extract_strided_slice %3 {offsets = [0, 17], sizes = [4, 1], strides = [1, 1]} : vector<4x36xf32> to vector<4x1xf32>
    %220 = vector.extract_strided_slice %212 {offsets = [1, 0], sizes = [1, 384], strides = [1, 1]} : vector<4x384xf32> to vector<1x384xf32>
    %221 = vector.broadcast %219 : vector<4x1xf32> to vector<4x384xf32>
    %222 = vector.broadcast %220 : vector<1x384xf32> to vector<4x384xf32>
    %223 = arith.mulf %221, %222 : vector<4x384xf32>
    %224 = arith.addf %218, %223 : vector<4x384xf32>
    %225 = vector.extract_strided_slice %3 {offsets = [0, 26], sizes = [4, 1], strides = [1, 1]} : vector<4x36xf32> to vector<4x1xf32>
    %226 = vector.extract_strided_slice %212 {offsets = [2, 0], sizes = [1, 384], strides = [1, 1]} : vector<4x384xf32> to vector<1x384xf32>
    %227 = vector.broadcast %225 : vector<4x1xf32> to vector<4x384xf32>
    %228 = vector.broadcast %226 : vector<1x384xf32> to vector<4x384xf32>
    %229 = arith.mulf %227, %228 : vector<4x384xf32>
    %230 = arith.addf %224, %229 : vector<4x384xf32>
    %231 = vector.extract_strided_slice %3 {offsets = [0, 35], sizes = [4, 1], strides = [1, 1]} : vector<4x36xf32> to vector<4x1xf32>
    %232 = vector.extract_strided_slice %212 {offsets = [3, 0], sizes = [1, 384], strides = [1, 1]} : vector<4x384xf32> to vector<1x384xf32>
    %233 = vector.broadcast %231 : vector<4x1xf32> to vector<4x384xf32>
    %234 = vector.broadcast %232 : vector<1x384xf32> to vector<4x384xf32>
    %235 = arith.mulf %233, %234 : vector<4x384xf32>
    %236 = arith.addf %230, %235 : vector<4x384xf32>
    %c384_i32 = arith.constant 384 : i32
    %237 = arith.muli %arg0, %c384_i32 : i32
    %238 = tpu.assume_multiple %237, 128 : i32
    %c0_21 = arith.constant 0 : index
    %239 = arith.index_cast %238 : i32 to index
    %240 = vector.load %arg6[%c0_21, %239] : memref<4x768xf32, #tpu.memory_space<vmem>>, vector<4x384xf32>
    tpu.vector_store %arg6[%c0_21, %239], %236 {strides = array<i32>} : memref<4x768xf32, #tpu.memory_space<vmem>>, vector<4x384xf32>,
    %c0_22 = arith.constant 0 : index
    %c0_23 = arith.constant 0 : index
    %241 = vector.load %arg4[%c0_22, %c0_23] : memref<1x768xf32, #tpu.memory_space<vmem>>, vector<1x384xf32>
    %242 = vector.broadcast %241 : vector<1x384xf32> to vector<4x384xf32>
    %243 = arith.mulf %236, %242 : vector<4x384xf32>
    %c0_24 = arith.constant 0 : index
    %c0_25 = arith.constant 0 : index
    %244 = vector.load %arg7[%c0_24, %c0_25] : memref<4x1xf32, #tpu.memory_space<vmem>>, vector<4x1xf32>
    %cst = arith.constant dense<0.000000e+00> : vector<4xf32>
    %245 = vector.multi_reduction <add>, %243, %cst [1] : vector<4x384xf32> to vector<4xf32>
    %246 = vector.shape_cast %245 : vector<4xf32> to vector<4x1xf32>
    %247 = arith.addf %244, %246 : vector<4x1xf32>
    %c0_26 = arith.constant 0 : index
    %c0_27 = arith.constant 0 : index
    %248 = vector.load %arg7[%c0_26, %c0_27] : memref<4x1xf32, #tpu.memory_space<vmem>>, vector<4x1xf32>
    tpu.vector_store %arg7[%c0_26, %c0_27], %247 {strides = array<i32>} : memref<4x1xf32, #tpu.memory_space<vmem>>, vector<4x1xf32>,
    %c0_28 = arith.constant 0 : index
    %c0_29 = arith.constant 0 : index
    %249 = vector.load %arg8[%c0_28, %c0_29] : memref<4x1xf32, #tpu.memory_space<vmem>>, vector<4x1xf32>
    %250 = arith.mulf %243, %243 : vector<4x384xf32>
    %cst_30 = arith.constant dense<0.000000e+00> : vector<4xf32>
    %251 = vector.multi_reduction <add>, %250, %cst_30 [1] : vector<4x384xf32> to vector<4xf32>
    %252 = vector.shape_cast %251 : vector<4xf32> to vector<4x1xf32>
    %253 = arith.addf %249, %252 : vector<4x1xf32>
    %c0_31 = arith.constant 0 : index
    %c0_32 = arith.constant 0 : index
    %254 = vector.load %arg8[%c0_31, %c0_32] : memref<4x1xf32, #tpu.memory_space<vmem>>, vector<4x1xf32>
    tpu.vector_store %arg8[%c0_31, %c0_32], %253 {strides = array<i32>} : memref<4x1xf32, #tpu.memory_space<vmem>>, vector<4x1xf32>,
    %c1_i32 = arith.constant 1 : i32
    %255 = arith.cmpi eq, %arg0, %c1_i32 : i32
    %256 = arith.extui %255 : i1 to i32
    %c0_i32_33 = arith.constant 0 : i32
    %257 = arith.cmpi ne, %256, %c0_i32_33 : i32
    scf.if %257 {
      %c0_34 = arith.constant 0 : index
      %c0_35 = arith.constant 0 : index
      %258 = vector.load %arg3[%c0_34, %c0_35] : memref<4x4xf32, #tpu.memory_space<vmem>>, vector<4x1xf32>
      %c0_36 = arith.constant 0 : index
      %c1_37 = arith.constant 1 : index
      %259 = vector.load %arg3[%c0_36, %c1_37] : memref<4x4xf32, #tpu.memory_space<vmem>>, vector<4x1xf32>
      %c0_38 = arith.constant 0 : index
      %c2_39 = arith.constant 2 : index
      %260 = vector.load %arg3[%c0_38, %c2_39] : memref<4x4xf32, #tpu.memory_space<vmem>>, vector<4x1xf32>
      %c0_40 = arith.constant 0 : index
      %c3 = arith.constant 3 : index
      %261 = vector.load %arg3[%c0_40, %c3] : memref<4x4xf32, #tpu.memory_space<vmem>>, vector<4x1xf32>
      %c0_41 = arith.constant 0 : index
      %c0_42 = arith.constant 0 : index
      %262 = vector.load %arg4[%c0_41, %c0_42] : memref<1x768xf32, #tpu.memory_space<vmem>>, vector<1x768xf32>
      %c0_43 = arith.constant 0 : index
      %c0_44 = arith.constant 0 : index
      %263 = vector.load %arg7[%c0_43, %c0_44] : memref<4x1xf32, #tpu.memory_space<vmem>>, vector<4x1xf32>
      %cst_45 = arith.constant 0.001953125 : f32
      %264 = vector.broadcast %cst_45 : f32 to vector<4x1xf32>
      %265 = arith.mulf %263, %264 : vector<4x1xf32>
      %c0_46 = arith.constant 0 : index
      %c0_47 = arith.constant 0 : index
      %266 = vector.load %arg8[%c0_46, %c0_47] : memref<4x1xf32, #tpu.memory_space<vmem>>, vector<4x1xf32>
      %cst_48 = arith.constant 0.001953125 : f32
      %267 = vector.broadcast %cst_48 : f32 to vector<4x1xf32>
      %268 = arith.mulf %266, %267 : vector<4x1xf32>
      %269 = arith.mulf %265, %265 : vector<4x1xf32>
      %270 = arith.subf %268, %269 : vector<4x1xf32>
      %cst_49 = arith.constant 9.99999974E-6 : f32
      %271 = vector.broadcast %cst_49 : f32 to vector<4x1xf32>
      %272 = arith.addf %270, %271 : vector<4x1xf32>
      %273 = math.rsqrt %272 : vector<4x1xf32>
      %274 = arith.mulf %258, %273 : vector<4x1xf32>
      %275 = arith.mulf %265, %274 : vector<4x1xf32>
      %276 = arith.subf %259, %275 : vector<4x1xf32>
      %c0_50 = arith.constant 0 : index
      %c0_51 = arith.constant 0 : index
      %277 = vector.load %arg6[%c0_50, %c0_51] : memref<4x768xf32, #tpu.memory_space<vmem>>, vector<4x768xf32>
      %278 = vector.broadcast %274 : vector<4x1xf32> to vector<4x768xf32>
      %279 = arith.mulf %277, %278 : vector<4x768xf32>
      %280 = vector.broadcast %276 : vector<4x1xf32> to vector<4x768xf32>
      %281 = arith.addf %279, %280 : vector<4x768xf32>
      %cst_52 = arith.constant 0.000000e+00 : f32
      %282 = vector.broadcast %cst_52 : f32 to vector<4x768xf32>
      %283 = arith.maximumf %281, %282 : vector<4x768xf32>
      %284 = vector.broadcast %262 : vector<1x768xf32> to vector<4x768xf32>
      %285 = arith.mulf %283, %284 : vector<4x768xf32>
      %cst_53 = arith.constant dense<0.000000e+00> : vector<4xf32>
      %286 = vector.multi_reduction <add>, %285, %cst_53 [1] : vector<4x768xf32> to vector<4xf32>
      %287 = vector.shape_cast %286 : vector<4xf32> to vector<4x1xf32>
      %cst_54 = arith.constant 0.001953125 : f32
      %288 = vector.broadcast %cst_54 : f32 to vector<4x1xf32>
      %289 = arith.mulf %287, %288 : vector<4x1xf32>
      %290 = arith.mulf %285, %285 : vector<4x768xf32>
      %cst_55 = arith.constant dense<0.000000e+00> : vector<4xf32>
      %291 = vector.multi_reduction <add>, %290, %cst_55 [1] : vector<4x768xf32> to vector<4xf32>
      %292 = vector.shape_cast %291 : vector<4xf32> to vector<4x1xf32>
      %cst_56 = arith.constant 0.001953125 : f32
      %293 = vector.broadcast %cst_56 : f32 to vector<4x1xf32>
      %294 = arith.mulf %292, %293 : vector<4x1xf32>
      %295 = arith.mulf %289, %289 : vector<4x1xf32>
      %296 = arith.subf %294, %295 : vector<4x1xf32>
      %cst_57 = arith.constant 9.99999974E-6 : f32
      %297 = vector.broadcast %cst_57 : f32 to vector<4x1xf32>
      %298 = arith.addf %296, %297 : vector<4x1xf32>
      %299 = math.rsqrt %298 : vector<4x1xf32>
      %300 = arith.mulf %260, %299 : vector<4x1xf32>
      %301 = arith.mulf %289, %300 : vector<4x1xf32>
      %302 = arith.subf %261, %301 : vector<4x1xf32>
      %303 = vector.broadcast %300 : vector<4x1xf32> to vector<4x768xf32>
      %304 = arith.mulf %283, %303 : vector<4x768xf32>
      %305 = vector.broadcast %302 : vector<4x1xf32> to vector<4x768xf32>
      %306 = arith.addf %304, %305 : vector<4x768xf32>
      %cst_58 = arith.constant 0.000000e+00 : f32
      %307 = vector.broadcast %cst_58 : f32 to vector<4x768xf32>
      %308 = arith.maximumf %306, %307 : vector<4x768xf32>
      %309 = arith.mulf %308, %308 : vector<4x768xf32>
      %cst_59 = arith.constant dense<0.000000e+00> : vector<768xf32>
      %310 = vector.multi_reduction <add>, %309, %cst_59 [0] : vector<4x768xf32> to vector<768xf32>
      %311 = vector.shape_cast %310 : vector<768xf32> to vector<1x768xf32>
      %cst_60 = arith.constant 5.000000e-01 : f32
      %312 = vector.broadcast %cst_60 : f32 to vector<1x768xf32>
      %313 = arith.mulf %311, %312 : vector<1x768xf32>
      %cst_61 = arith.constant 9.99999993E-9 : f32
      %314 = vector.broadcast %cst_61 : f32 to vector<1x768xf32>
      %315 = arith.addf %313, %314 : vector<1x768xf32>
      %316 = math.log %315 : vector<1x768xf32>
      %cst_62 = arith.constant 1.000000e+00 : f32
      %317 = vector.broadcast %cst_62 : f32 to vector<1x768xf32>
      %318 = arith.mulf %317, %316 : vector<1x768xf32>
      %319 = arith.subf %318, %313 : vector<1x768xf32>
      %cst_63 = arith.constant 9.99999993E-9 : f32
      %320 = vector.broadcast %cst_63 : f32 to vector<1x768xf32>
      %321 = arith.addf %313, %320 : vector<1x768xf32>
      %cst_64 = arith.constant 1.000000e+00 : f32
      %322 = vector.broadcast %cst_64 : f32 to vector<1x768xf32>
      %323 = arith.divf %322, %321 : vector<1x768xf32>
      %cst_65 = arith.constant 1.000000e+00 : f32
      %324 = vector.broadcast %cst_65 : f32 to vector<1x768xf32>
      %325 = arith.addf %324, %323 : vector<1x768xf32>
      %326 = arith.mulf %313, %313 : vector<1x768xf32>
      %cst_66 = arith.constant 9.99999993E-9 : f32
      %327 = vector.broadcast %cst_66 : f32 to vector<1x768xf32>
      %328 = arith.addf %326, %327 : vector<1x768xf32>
      %cst_67 = arith.constant 0.000000e+00 : f32
      %329 = vector.broadcast %cst_67 : f32 to vector<1x768xf32>
      %330 = arith.divf %329, %328 : vector<1x768xf32>
      %331 = arith.addf %325, %330 : vector<1x768xf32>
      %332 = math.log %331 : vector<1x768xf32>
      %333 = arith.addf %319, %332 : vector<1x768xf32>
      %cst_68 = arith.constant -5.54517746 : f32
      %334 = vector.broadcast %cst_68 : f32 to vector<1x768xf32>
      %335 = arith.subf %334, %333 : vector<1x768xf32>
      %cst_69 = arith.constant 0.000000e+00 : f32
      %336 = vector.broadcast %cst_69 : f32 to vector<1x768xf32>
      %337 = arith.maximumf %335, %336 : vector<1x768xf32>
      %c0_70 = arith.constant 0 : index
      %c0_71 = arith.constant 0 : index
      %338 = vector.load %arg5[%c0_70, %c0_71] : memref<1x768xf32, #tpu.memory_space<vmem>>, vector<1x768xf32>
      tpu.vector_store %arg5[%c0_70, %c0_71], %337 {strides = array<i32>} : memref<1x768xf32, #tpu.memory_space<vmem>>, vector<1x768xf32>,
    } else {
    }
    return
  }
  func.func @transform_0(%arg0: i32) -> (i32, i32, i32) {
    %c0_i32 = arith.constant 0 : i32
    %c0_i32_0 = arith.constant 0 : i32
    %c0_i32_1 = arith.constant 0 : i32
    return %arg0, %c0_i32, %c0_i32_0 : i32, i32, i32
  }
  func.func @transform_1(%arg0: i32) -> (i32, i32) {
    %c0_i32 = arith.constant 0 : i32
    %c0_i32_0 = arith.constant 0 : i32
    %c0_i32_1 = arith.constant 0 : i32
    return %c0_i32, %c0_i32_0 : i32, i32
  }
  func.func @transform_2(%arg0: i32) -> (i32, i32) {
    %c0_i32 = arith.constant 0 : i32
    %c0_i32_0 = arith.constant 0 : i32
    %c0_i32_1 = arith.constant 0 : i32
    return %c0_i32, %c0_i32_0 : i32, i32
  }
  func.func @transform_3(%arg0: i32) -> (i32, i32) {
    %c0_i32 = arith.constant 0 : i32
    %c0_i32_0 = arith.constant 0 : i32
    %c0_i32_1 = arith.constant 0 : i32
    return %c0_i32, %c0_i32_0 : i32, i32
  }
  func.func @transform_4(%arg0: i32) -> (i32, i32) {
    %c0_i32 = arith.constant 0 : i32
    %c0_i32_0 = arith.constant 0 : i32
    %c0_i32_1 = arith.constant 0 : i32
    return %c0_i32, %c0_i32_0 : i32, i32
  }
}

</mosaic_0001>

<llo_original>
// kernel: tpu_custom_call.1
$region0: #{tpu_custom_call.1}
  #allocation0 [shape = 'u32[]', space=smem, size = 0x4, offset = 0x4, fixed_abs, tag = 'smem constant byte address 0x4 - core index']
  #allocation1 [shape = 'u32[144,128]{1,0:T(1,128)}', space=vmem, size = 0x12000, scoped, tag = 'internal scratch']
  #allocation2 [shape = 'f32[4,768]{1,0:T(4,128)}', space=vmem, size = 0x3000, scoped, tag = 'scratch operand']
  #allocation3 [shape = 'f32[4,1]{1,0:T(4,128)}', space=vmem, size = 0x800, scoped, tag = 'scratch operand']
  #allocation4 [shape = 'f32[4,1]{1,0:T(4,128)}', space=vmem, size = 0x800, scoped, tag = 'scratch operand']
  %s0 = inlined_call_operand.hbm [shape: f32[2,4,512], index: 0, kind: input, shape index: {}]
  %s1 = inlined_call_operand.hbm [shape: f32[4,36], index: 1, kind: input, shape index: {}]
  %s2 = inlined_call_operand.hbm [shape: f32[4,4], index: 2, kind: input, shape index: {}]
  %s3 = inlined_call_operand.hbm [shape: f32[1,768], index: 3, kind: input, shape index: {}]
  %s4 = inlined_call_operand.hbm [shape: f32[1,768], index: 4, kind: output, shape index: {}]
  %s5 = sld [smem:[#allocation0]]
  $region73: #{tpu_custom_call.1} parent=0
    _
  %s7 = ssub.s32 1, %s5
  %s8 = scalar_select 0, %s7, %s5
  $region1: #{tpu_custom_call.1} parent=0
    #allocation5 [shape = 'u8[16384]{0}', space=vmem, size = 0x4000, scoped, tag = 'input window, operand 0']
    #allocation6 [shape = 's32[2]{0}', space=sflag, size = 0x8, scoped, tag = 'scoped memory for tpu_custom_call.1']
    #allocation7 [shape = 's32[2]{0}', space=sflag, size = 0x8, scoped, tag = 'scoped memory for tpu_custom_call.1']
    #allocation8 [shape = 'u8[2048]{0}', space=vmem, size = 0x800, scoped, tag = 'input window, operand 1, single buffered']
    #allocation9 [shape = 's32[1]{0}', space=sflag, size = 0x4, scoped, tag = 'scoped memory for tpu_custom_call.1']
    #allocation10 [shape = 'u8[2048]{0}', space=vmem, size = 0x800, scoped, tag = 'input window, operand 2, single buffered']
    #allocation11 [shape = 'u8[3072]{0}', space=vmem, size = 0xc00, scoped, tag = 'input window, operand 3, single buffered']
    #allocation12 [shape = 's32[1]{0}', space=sflag, size = 0x4, scoped, tag = 'scoped memory for tpu_custom_call.1']
    #allocation13 [shape = 'u8[3072]{0}', space=vmem, size = 0xc00, scoped, tag = 'output window, operand 0, single buffered']
    %9 = vsyncpa [#allocation6], 0
    %s10 = scalar_lea.sflag [#allocation6], 1
    %11 = vsyncpa %s10, 0
    %12 = vsyncpa [#allocation9], 0
    %13 = vsyncpa [#allocation12], 0
    %14 = vsyncpa [#allocation7], 0
    loop: start=0, step=1, limit=4
    $region2: #{tpu_custom_call.1} parent=1 // loop_pre_header
      _
    $region3: #{tpu_custom_call.1} parent=1 // loop_header
      %s16 = sphi 0, %s20
      %p17 = scmp.ge.s32.totalorder %s16, 4
      %s26 = sphi 0, %s28
      %s29 = sphi 0, %s26
      %s30 = sphi 0, %s29
      %s46 = sphi 0, %s30
      %s50 = sphi 0, %s50
      %s52 = sphi 0, %s50
      %s53 = sphi 0, %s52
      %s67 = sphi 0, %s53
      %s71 = sphi 0, %s71
      %s73 = sphi 0, %s71
      %s74 = sphi 0, %s73
      %s88 = sphi 0, %s74
      %s92 = sphi 0, %s92
      %s94 = sphi 0, %s92
      %s95 = sphi 0, %s94
      %s109 = sphi 0, %s95
      %s113 = sphi 0, %s113
      %s115 = sphi 0, %s113
      %s116 = sphi 0, %s115
      %s130 = sphi 0, %s116
    $region4: #{tpu_custom_call.1} parent=1 // loop_header_branch
      %19 = sbr.rel (%p17) target = $region8
    $region5: #{tpu_custom_call.1} parent=1 // loop_body
      %s21 = ssub.s32 %s16, 1
      %s22 = ssub.s32 %s16, 2
      %s23 = sadd.s32 %s16, 1
      %s24 = ssub.s32 %s16, %s23
      %p25 = scmp.eq.s32.totalorder %s24, 0
      %s27 = sadd.s32 %s26, 1
      %s28 = scalar_select %p25, %s26, %s27
      %p31 = pneg %p25
      %p32 = scmp.eq.s32.totalorder %s16, 1
      %p33 = por %p31, %p32
      %p34 = scmp.ne.s32.totalorder %s26, %s29
      %p35 = scmp.eq.s32.totalorder %s16, 0
      %p36 = por %p34, %p35
      %p37 = scmp.ne.s32.totalorder %s26, %s29
      %p38 = scmp.eq.s32.totalorder %s21, 1
      %p39 = por %p37, %p38
      %p40 = scmp.ne.s32.totalorder %s29, %s30
      %p41 = scmp.eq.s32.totalorder %s21, 0
      %p42 = por %p40, %p41
      %p43 = scmp.ne.s32.totalorder %s29, %s30
      %p44 = scmp.eq.s32.totalorder %s22, 1
      %p45 = por %p43, %p44
      %p47 = scmp.ne.s32.totalorder %s30, %s46
      %p48 = scmp.eq.s32.totalorder %s22, 0
      %p49 = por %p47, %p48
      %s51 = sadd.s32 %s50, 1
      %p54 = scmp.eq.s32.totalorder %s16, 1
      %p55 = scmp.ne.s32.totalorder %s50, %s52
      %p56 = scmp.eq.s32.totalorder %s16, 0
      %p57 = por %p55, %p56
      %p58 = scmp.ne.s32.totalorder %s50, %s52
      %p59 = scmp.eq.s32.totalorder %s21, 1
      %p60 = por %p58, %p59
      %p61 = scmp.ne.s32.totalorder %s52, %s53
      %p62 = scmp.eq.s32.totalorder %s21, 0
      %p63 = por %p61, %p62
      %p64 = scmp.ne.s32.totalorder %s52, %s53
      %p65 = scmp.eq.s32.totalorder %s22, 1
      %p66 = por %p64, %p65
      %p68 = scmp.ne.s32.totalorder %s53, %s67
      %p69 = scmp.eq.s32.totalorder %s22, 0
      %p70 = por %p68, %p69
      %s72 = sadd.s32 %s71, 1
      %p75 = scmp.eq.s32.totalorder %s16, 1
      %p76 = scmp.ne.s32.totalorder %s71, %s73
      %p77 = scmp.eq.s32.totalorder %s16, 0
      %p78 = por %p76, %p77
      %p79 = scmp.ne.s32.totalorder %s71, %s73
      %p80 = scmp.eq.s32.totalorder %s21, 1
      %p81 = por %p79, %p80
      %p82 = scmp.ne.s32.totalorder %s73, %s74
      %p83 = scmp.eq.s32.totalorder %s21, 0
      %p84 = por %p82, %p83
      %p85 = scmp.ne.s32.totalorder %s73, %s74
      %p86 = scmp.eq.s32.totalorder %s22, 1
      %p87 = por %p85, %p86
      %p89 = scmp.ne.s32.totalorder %s74, %s88
      %p90 = scmp.eq.s32.totalorder %s22, 0
      %p91 = por %p89, %p90
      %s93 = sadd.s32 %s92, 1
      %p96 = scmp.eq.s32.totalorder %s16, 1
      %p97 = scmp.ne.s32.totalorder %s92, %s94
      %p98 = scmp.eq.s32.totalorder %s16, 0
      %p99 = por %p97, %p98
      %p100 = scmp.ne.s32.totalorder %s92, %s94
      %p101 = scmp.eq.s32.totalorder %s21, 1
      %p102 = por %p100, %p101
      %p103 = scmp.ne.s32.totalorder %s94, %s95
      %p104 = scmp.eq.s32.totalorder %s21, 0
      %p105 = por %p103, %p104
      %p106 = scmp.ne.s32.totalorder %s94, %s95
      %p107 = scmp.eq.s32.totalorder %s22, 1
      %p108 = por %p106, %p107
      %p110 = scmp.ne.s32.totalorder %s95, %s109
      %p111 = scmp.eq.s32.totalorder %s22, 0
      %p112 = por %p110, %p111
      %s114 = sadd.s32 %s113, 1
      %p117 = scmp.eq.s32.totalorder %s16, 1
      %p118 = scmp.ne.s32.totalorder %s113, %s115
      %p119 = scmp.eq.s32.totalorder %s16, 0
      %p120 = por %p118, %p119
      %p121 = scmp.ne.s32.totalorder %s113, %s115
      %p122 = scmp.eq.s32.totalorder %s21, 1
      %p123 = por %p121, %p122
      %p124 = scmp.ne.s32.totalorder %s115, %s116
      %p125 = scmp.eq.s32.totalorder %s21, 0
      %p126 = por %p124, %p125
      %p127 = scmp.ne.s32.totalorder %s115, %s116
      %p128 = scmp.eq.s32.totalorder %s22, 1
      %p129 = por %p127, %p128
      %p131 = scmp.ne.s32.totalorder %s116, %s130
      %p132 = scmp.eq.s32.totalorder %s22, 0
      %p133 = por %p131, %p132
      %p134 = scmp.le.s32.totalorder 1, %s16
      %p135 = scmp.lt.s32.totalorder %s16, 3
      %p136 = pnand %p134, %p135
      %p137 = pneg %p136
      // Predicated region
      $region9: #{tpu_custom_call.1} parent=5 // pred_check
        _
      $region10: #{tpu_custom_call.1} parent=5 // pred_check_branch
        %139 = sbr.rel (%p136) target = $region12
      $region11: #{tpu_custom_call.1} parent=5 // pred_region
        %s140 = ssub.s32 %s16, 1
        // Predicated region
        $region13: #{tpu_custom_call.1} parent=11 // pred_check
          %p141 = pneg %p63
        $region14: #{tpu_custom_call.1} parent=11 // pred_check_branch
          %143 = sbr.rel (%p141) target = $region16
        $region15: #{tpu_custom_call.1} parent=11 // pred_region
          %s145 = ssub.s32 64, 64
          %146 = vsyncadd [#allocation9], %s145
          %s148 = sshll.u32 [#allocation8], 4
          %s149 = int_to_ptr.vmem [resolvable:$true] %s148
          %151 = dma.hbm_to_vmem [thread:$0]  %s1, 64, %s149, [#allocation9]
        $region16: #{tpu_custom_call.1} parent=11 // pred_fallthru
          _
        // Predicated region
        $region17: #{tpu_custom_call.1} parent=11 // pred_check
          %p152 = pneg %p84
        $region18: #{tpu_custom_call.1} parent=11 // pred_check_branch
          %154 = sbr.rel (%p152) target = $region20
        $region19: #{tpu_custom_call.1} parent=11 // pred_region
          %s156 = ssub.s32 64, 64
          %157 = vsyncadd [#allocation9], %s156
          %s159 = sshll.u32 [#allocation10], 4
          %s160 = int_to_ptr.vmem [resolvable:$true] %s159
          %162 = dma.hbm_to_vmem [thread:$0]  %s2, 64, %s160, [#allocation9]
        $region20: #{tpu_custom_call.1} parent=11 // pred_fallthru
          _
        // Predicated region
        $region21: #{tpu_custom_call.1} parent=11 // pred_check
          %p163 = pneg %p105
        $region22: #{tpu_custom_call.1} parent=11 // pred_check_branch
          %165 = sbr.rel (%p163) target = $region24
        $region23: #{tpu_custom_call.1} parent=11 // pred_region
          %s167 = ssub.s32 96, 96
          %168 = vsyncadd [#allocation12], %s167
          %s170 = sshll.u32 [#allocation11], 4
          %s171 = int_to_ptr.vmem [resolvable:$true] %s170
          %173 = dma.hbm_to_vmem [thread:$0]  %s3, 96, %s171, [#allocation12]
        $region24: #{tpu_custom_call.1} parent=11 // pred_fallthru
          _
      $region12: #{tpu_custom_call.1} parent=5 // pred_fallthru
        _
      %p174 = scmp.lt.s32.totalorder %s16, 2
      // Predicated region
      $region25: #{tpu_custom_call.1} parent=5 // pred_check
        %p175 = pneg %p174
      $region26: #{tpu_custom_call.1} parent=5 // pred_check_branch
        %177 = sbr.rel (%p175) target = $region28
      $region27: #{tpu_custom_call.1} parent=5 // pred_region
        // Predicated region
        $region29: #{tpu_custom_call.1} parent=27 // pred_check
          %p178 = pneg %p36
        $region30: #{tpu_custom_call.1} parent=27 // pred_check_branch
          %180 = sbr.rel (%p178) target = $region32
        $region31: #{tpu_custom_call.1} parent=27 // pred_region
          %s181 = sand.u32 %s26, 1
          %s182 = scalar_lea.sflag [#allocation6], %s181
          %s183 = sand.u32 %s26, 1
          %s184 = smul.addr %s183, 16
          %s185 = scalar_lea.vmem [#allocation5], %s184
          %s187 = ssub.s32 256, 256
          %188 = vsyncadd %s182, %s187
          %s189 = smul.addr %s16, 4
          %s190 = smul.addr %s189, 64
          %s191 = scalar_lea.hbm %s0, %s190
          %s193 = sshll.u32 %s185, 4
          %s194 = int_to_ptr.vmem [resolvable:$true] %s193
          %196 = dma.hbm_to_vmem [thread:$0]  %s191, 256, %s194, %s182
        $region32: #{tpu_custom_call.1} parent=27 // pred_fallthru
          _
      $region28: #{tpu_custom_call.1} parent=5 // pred_fallthru
        _
      %p197 = scmp.le.s32.totalorder 1, %s16
      %p198 = scmp.lt.s32.totalorder %s16, 3
      %p199 = pnand %p197, %p198
      %p200 = pneg %p199
      // Predicated region
      $region33: #{tpu_custom_call.1} parent=5 // pred_check
        _
      $region34: #{tpu_custom_call.1} parent=5 // pred_check_branch
        %202 = sbr.rel (%p199) target = $region36
      $region35: #{tpu_custom_call.1} parent=5 // pred_region
        %s203 = ssub.s32 %s16, 1
        %s204 = sand.u32 %s29, 1
        %s205 = scalar_lea.sflag [#allocation6], %s204
        %s206 = sand.u32 %s29, 1
        %s207 = smul.addr %s206, 16
        %s208 = scalar_lea.vmem [#allocation5], %s207
        // Predicated region
        $region37: #{tpu_custom_call.1} parent=35 // pred_check
          %p209 = pneg %p42
        $region38: #{tpu_custom_call.1} parent=35 // pred_check_branch
          %211 = sbr.rel (%p209) target = $region40
        $region39: #{tpu_custom_call.1} parent=35 // pred_region
          %212 = dma.done %s205, 256
        $region40: #{tpu_custom_call.1} parent=35 // pred_fallthru
          _
        // Predicated region
        $region41: #{tpu_custom_call.1} parent=35 // pred_check
          %p213 = pneg %p63
        $region42: #{tpu_custom_call.1} parent=35 // pred_check_branch
          %215 = sbr.rel (%p213) target = $region44
        $region43: #{tpu_custom_call.1} parent=35 // pred_region
          %216 = dma.done [#allocation9], 64
        $region44: #{tpu_custom_call.1} parent=35 // pred_fallthru
          _
        // Predicated region
        $region45: #{tpu_custom_call.1} parent=35 // pred_check
          %p217 = pneg %p84
        $region46: #{tpu_custom_call.1} parent=35 // pred_check_branch
          %219 = sbr.rel (%p217) target = $region48
        $region47: #{tpu_custom_call.1} parent=35 // pred_region
          %220 = dma.done [#allocation9], 64
        $region48: #{tpu_custom_call.1} parent=35 // pred_fallthru
          _
        // Predicated region
        $region49: #{tpu_custom_call.1} parent=35 // pred_check
          %p221 = pneg %p105
        $region50: #{tpu_custom_call.1} parent=35 // pred_check_branch
          %223 = sbr.rel (%p221) target = $region52
        $region51: #{tpu_custom_call.1} parent=35 // pred_region
          %224 = dma.done [#allocation12], 96
        $region52: #{tpu_custom_call.1} parent=35 // pred_fallthru
          _
        %s225 = sand.u32 %s29, 1
        %s226 = scalar_lea.sflag [#allocation6], %s225
        %s227 = sand.u32 %s29, 1
        %s228 = smul.addr %s227, 16
        %s229 = scalar_lea.vmem [#allocation5], %s228
        %p230 = pneg %p42
        %p231 = pneg %p39
        %p232 = pneg %p63
        %p233 = pneg %p60
        %p234 = pneg %p84
        %p235 = pneg %p81
        %p236 = pneg %p105
        %p237 = pneg %p102
        %p238 = pneg %p126
        %p239 = pneg %p123
        %p240 = scmp.eq.s32.totalorder %s21, 0
        // Predicated region
        $region53: #{tpu_custom_call.1} parent=35 // pred_check
          %p241 = pneg %p240
        $region54: #{tpu_custom_call.1} parent=35 // pred_check_branch
          %243 = sbr.rel (%p241) target = $region56
        $region55: #{tpu_custom_call.1} parent=35 // pred_region
          %vm244 = vcmask 3072
          %245 = vst.msk [vmem:[#allocation3] sm:$0xf] %vm244, 0.0
          %246 = vst.msk [vmem:[#allocation4] sm:$0xf] %vm244, 0.0
        $region56: #{tpu_custom_call.1} parent=35 // pred_fallthru
          _
        %v247 = vld [vmem:[#allocation8] sm:$0xf]
        %v248 = vld [vmem:[%s208] sm:$0xff]
        %v249 = vld [vmem:[%s208 + $0x8] sm:$0xf]
        %251 = vset.pattern.permute.xlu0 0
        %252 = vperm.xlu0 %251, %v247
        %v253 = vpop.permute.xlu0 %252
        %v257 = vlaneseq
        %v258 = vshrl.u32 %v257, 7
        %v259 = vsub.s32 0, %v258
        %v260 = vrot.slane %v248, %v259
        %v261 = vlaneseq
        %v262 = vshrl.u32 %v261, 7
        %v263 = vsub.s32 4, %v262
        %v264 = vrot.slane %v248, %v263
        %v265 = vlaneseq
        %v266 = vshrl.u32 %v265, 7
        %v267 = vsub.s32 0, %v266
        %v268 = vrot.slane %v249, %v267
        %v272 = vlaneseq
        %v273 = vshrl.u32 %v272, 7
        %v274 = vsub.s32 0, %v273
        %v275 = vrot.slane %v260, %v274
        %v276 = vlaneseq
        %v277 = vshrl.u32 %v276, 7
        %v278 = vsub.s32 0, %v277
        %v279 = vrot.slane %v264, %v278
        %v280 = vlaneseq
        %v281 = vshrl.u32 %v280, 7
        %v282 = vsub.s32 0, %v281
        %v283 = vrot.slane %v268, %v282
        %v284 = vmul.f32 %v253, %v275
        %v285 = vmul.f32 %v253, %v279
        %v286 = vmul.f32 %v253, %v283
        %287 = vset.pattern.permute.xlu0 9
        %288 = vperm.xlu0 %287, %v247
        %v289 = vpop.permute.xlu0 %288
        %v291 = vlaneseq
        %v292 = vshrl.u32 %v291, 7
        %v293 = vsub.s32 1, %v292
        %v294 = vrot.slane %v248, %v293
        %v295 = vlaneseq
        %v296 = vshrl.u32 %v295, 7
        %v297 = vsub.s32 5, %v296
        %v298 = vrot.slane %v248, %v297
        %v299 = vlaneseq
        %v300 = vshrl.u32 %v299, 7
        %v301 = vsub.s32 1, %v300
        %v302 = vrot.slane %v249, %v301
        %v306 = vlaneseq
        %v307 = vshrl.u32 %v306, 7
        %v308 = vsub.s32 1, %v307
        %v309 = vrot.slane %v294, %v308
        %v310 = vlaneseq
        %v311 = vshrl.u32 %v310, 7
        %v312 = vsub.s32 1, %v311
        %v313 = vrot.slane %v298, %v312
        %v314 = vlaneseq
        %v315 = vshrl.u32 %v314, 7
        %v316 = vsub.s32 1, %v315
        %v317 = vrot.slane %v302, %v316
        %v318 = vmul.f32 %v289, %v309
        %v319 = vmul.f32 %v289, %v313
        %v320 = vmul.f32 %v289, %v317
        %v321 = vadd.f32 %v284, %v318
        %v322 = vadd.f32 %v285, %v319
        %v323 = vadd.f32 %v286, %v320
        %324 = vset.pattern.permute.xlu0 18
        %325 = vperm.xlu0 %324, %v247
        %v326 = vpop.permute.xlu0 %325
        %v328 = vlaneseq
        %v329 = vshrl.u32 %v328, 7
        %v330 = vsub.s32 2, %v329
        %v331 = vrot.slane %v248, %v330
        %v332 = vlaneseq
        %v333 = vshrl.u32 %v332, 7
        %v334 = vsub.s32 6, %v333
        %v335 = vrot.slane %v248, %v334
        %v336 = vlaneseq
        %v337 = vshrl.u32 %v336, 7
        %v338 = vsub.s32 2, %v337
        %v339 = vrot.slane %v249, %v338
        %v343 = vlaneseq
        %v344 = vshrl.u32 %v343, 7
        %v345 = vsub.s32 2, %v344
        %v346 = vrot.slane %v331, %v345
        %v347 = vlaneseq
        %v348 = vshrl.u32 %v347, 7
        %v349 = vsub.s32 2, %v348
        %v350 = vrot.slane %v335, %v349
        %v351 = vlaneseq
        %v352 = vshrl.u32 %v351, 7
        %v353 = vsub.s32 2, %v352
        %v354 = vrot.slane %v339, %v353
        %v355 = vmul.f32 %v326, %v346
        %v356 = vmul.f32 %v326, %v350
        %v357 = vmul.f32 %v326, %v354
        %v358 = vadd.f32 %v321, %v355
        %v359 = vadd.f32 %v322, %v356
        %v360 = vadd.f32 %v323, %v357
        %361 = vset.pattern.permute.xlu0 27
        %362 = vperm.xlu0 %361, %v247
        %v363 = vpop.permute.xlu0 %362
        %v365 = vlaneseq
        %v366 = vshrl.u32 %v365, 7
        %v367 = vsub.s32 3, %v366
        %v368 = vrot.slane %v248, %v367
        %v369 = vlaneseq
        %v370 = vshrl.u32 %v369, 7
        %v371 = vsub.s32 7, %v370
        %v372 = vrot.slane %v248, %v371
        %v373 = vlaneseq
        %v374 = vshrl.u32 %v373, 7
        %v375 = vsub.s32 3, %v374
        %v376 = vrot.slane %v249, %v375
        %v380 = vlaneseq
        %v381 = vshrl.u32 %v380, 7
        %v382 = vsub.s32 3, %v381
        %v383 = vrot.slane %v368, %v382
        %v384 = vlaneseq
        %v385 = vshrl.u32 %v384, 7
        %v386 = vsub.s32 3, %v385
        %v387 = vrot.slane %v372, %v386
        %v388 = vlaneseq
        %v389 = vshrl.u32 %v388, 7
        %v390 = vsub.s32 3, %v389
        %v391 = vrot.slane %v376, %v390
        %v392 = vmul.f32 %v363, %v383
        %v393 = vmul.f32 %v363, %v387
        %v394 = vmul.f32 %v363, %v391
        %v395 = vadd.f32 %v358, %v392
        %v396 = vadd.f32 %v359, %v393
        %v397 = vadd.f32 %v360, %v394
        %v398 = vld [vmem:[%s208] sm:$0xff]
        %v399 = vld [vmem:[%s208 + $0x8] sm:$0xff]
        %400 = vset.pattern.permute.xlu0 1
        %401 = vperm.xlu0 %400, %v247
        %v402 = vpop.permute.xlu0 %401
        %v406 = vlaneseq
        %v407 = vshrl.u32 %v406, 7
        %v408 = vsub.s32 0, %v407
        %v409 = vrot.slane %v398, %v408
        %v410 = vlaneseq
        %v411 = vshrl.u32 %v410, 7
        %v412 = vsub.s32 4, %v411
        %v413 = vrot.slane %v398, %v412
        %v414 = vlaneseq
        %v415 = vshrl.u32 %v414, 7
        %v416 = vsub.s32 0, %v415
        %v417 = vrot.slane %v399, %v416
        %v418 = vlaneseq
        %v419 = vshrl.u32 %v418, 7
        %v420 = vsub.s32 4, %v419
        %v421 = vrot.slane %v399, %v420
        %v426 = vlaneseq
        %v427 = vshrl.u32 %v426, 7
        %v428 = vsub.s32 0, %v427
        %v429 = vrot.slane %v409, %v428
        %v430 = vlaneseq
        %v431 = vshrl.u32 %v430, 7
        %v432 = vsub.s32 0, %v431
        %v433 = vrot.slane %v413, %v432
        %v434 = vlaneseq
        %v435 = vshrl.u32 %v434, 7
        %v436 = vsub.s32 0, %v435
        %v437 = vrot.slane %v417, %v436
        %v438 = vlaneseq
        %v439 = vshrl.u32 %v438, 7
        %v440 = vsub.s32 0, %v439
        %v441 = vrot.slane %v421, %v440
        %v442 = vmul.f32 %v402, %v429
        %v443 = vmul.f32 %v402, %v433
        %v444 = vmul.f32 %v402, %v437
        %v445 = vmul.f32 %v402, %v441
        %450 = vrot.lane.b32.xlu0 %v442, 127
        %v451 = vpop.permute.xlu0 %450
        %452 = vrot.lane.b32.xlu0 %v443, 127
        %v453 = vpop.permute.xlu0 %452
        %454 = vrot.lane.b32.xlu0 %v444, 127
        %v455 = vpop.permute.xlu0 %454
        %456 = vrot.lane.b32.xlu0 %v445, 127
        %v457 = vpop.permute.xlu0 %456
        %vm458 = vcmask 1039360
        %v459 = vsel %vm458, %v451, %v453
        %v460 = vsel %vm458, %v453, %v455
        %v461 = vsel %vm458, %v455, %v457
        %v465 = vadd.f32 %v395, %v459
        %v466 = vadd.f32 %v396, %v460
        %v467 = vadd.f32 %v397, %v461
        %468 = vset.pattern.permute.xlu0 10
        %469 = vperm.xlu0 %468, %v247
        %v470 = vpop.permute.xlu0 %469
        %v472 = vlaneseq
        %v473 = vshrl.u32 %v472, 7
        %v474 = vsub.s32 1, %v473
        %v475 = vrot.slane %v398, %v474
        %v476 = vlaneseq
        %v477 = vshrl.u32 %v476, 7
        %v478 = vsub.s32 5, %v477
        %v479 = vrot.slane %v398, %v478
        %v480 = vlaneseq
        %v481 = vshrl.u32 %v480, 7
        %v482 = vsub.s32 1, %v481
        %v483 = vrot.slane %v399, %v482
        %v484 = vlaneseq
        %v485 = vshrl.u32 %v484, 7
        %v486 = vsub.s32 5, %v485
        %v487 = vrot.slane %v399, %v486
        %v492 = vlaneseq
        %v493 = vshrl.u32 %v492, 7
        %v494 = vsub.s32 1, %v493
        %v495 = vrot.slane %v475, %v494
        %v496 = vlaneseq
        %v497 = vshrl.u32 %v496, 7
        %v498 = vsub.s32 1, %v497
        %v499 = vrot.slane %v479, %v498
        %v500 = vlaneseq
        %v501 = vshrl.u32 %v500, 7
        %v502 = vsub.s32 1, %v501
        %v503 = vrot.slane %v483, %v502
        %v504 = vlaneseq
        %v505 = vshrl.u32 %v504, 7
        %v506 = vsub.s32 1, %v505
        %v507 = vrot.slane %v487, %v506
        %v508 = vmul.f32 %v470, %v495
        %v509 = vmul.f32 %v470, %v499
        %v510 = vmul.f32 %v470, %v503
        %v511 = vmul.f32 %v470, %v507
        %516 = vrot.lane.b32.xlu0 %v508, 127
        %v517 = vpop.permute.xlu0 %516
        %518 = vrot.lane.b32.xlu0 %v509, 127
        %v519 = vpop.permute.xlu0 %518
        %520 = vrot.lane.b32.xlu0 %v510, 127
        %v521 = vpop.permute.xlu0 %520
        %522 = vrot.lane.b32.xlu0 %v511, 127
        %v523 = vpop.permute.xlu0 %522
        %v524 = vsel %vm458, %v517, %v519
        %v525 = vsel %vm458, %v519, %v521
        %v526 = vsel %vm458, %v521, %v523
        %v530 = vadd.f32 %v465, %v524
        %v531 = vadd.f32 %v466, %v525
        %v532 = vadd.f32 %v467, %v526
        %533 = vset.pattern.permute.xlu0 19
        %534 = vperm.xlu0 %533, %v247
        %v535 = vpop.permute.xlu0 %534
        %v537 = vlaneseq
        %v538 = vshrl.u32 %v537, 7
        %v539 = vsub.s32 2, %v538
        %v540 = vrot.slane %v398, %v539
        %v541 = vlaneseq
        %v542 = vshrl.u32 %v541, 7
        %v543 = vsub.s32 6, %v542
        %v544 = vrot.slane %v398, %v543
        %v545 = vlaneseq
        %v546 = vshrl.u32 %v545, 7
        %v547 = vsub.s32 2, %v546
        %v548 = vrot.slane %v399, %v547
        %v549 = vlaneseq
        %v550 = vshrl.u32 %v549, 7
        %v551 = vsub.s32 6, %v550
        %v552 = vrot.slane %v399, %v551
        %v557 = vlaneseq
        %v558 = vshrl.u32 %v557, 7
        %v559 = vsub.s32 2, %v558
        %v560 = vrot.slane %v540, %v559
        %v561 = vlaneseq
        %v562 = vshrl.u32 %v561, 7
        %v563 = vsub.s32 2, %v562
        %v564 = vrot.slane %v544, %v563
        %v565 = vlaneseq
        %v566 = vshrl.u32 %v565, 7
        %v567 = vsub.s32 2, %v566
        %v568 = vrot.slane %v548, %v567
        %v569 = vlaneseq
        %v570 = vshrl.u32 %v569, 7
        %v571 = vsub.s32 2, %v570
        %v572 = vrot.slane %v552, %v571
        %v573 = vmul.f32 %v535, %v560
        %v574 = vmul.f32 %v535, %v564
        %v575 = vmul.f32 %v535, %v568
        %v576 = vmul.f32 %v535, %v572
        %581 = vrot.lane.b32.xlu0 %v573, 127
        %v582 = vpop.permute.xlu0 %581
        %583 = vrot.lane.b32.xlu0 %v574, 127
        %v584 = vpop.permute.xlu0 %583
        %585 = vrot.lane.b32.xlu0 %v575, 127
        %v586 = vpop.permute.xlu0 %585
        %587 = vrot.lane.b32.xlu0 %v576, 127
        %v588 = vpop.permute.xlu0 %587
        %v589 = vsel %vm458, %v582, %v584
        %v590 = vsel %vm458, %v584, %v586
        %v591 = vsel %vm458, %v586, %v588
        %v595 = vadd.f32 %v530, %v589
        %v596 = vadd.f32 %v531, %v590
        %v597 = vadd.f32 %v532, %v591
        %598 = vset.pattern.permute.xlu0 28
        %599 = vperm.xlu0 %598, %v247
        %v600 = vpop.permute.xlu0 %599
        %v602 = vlaneseq
        %v603 = vshrl.u32 %v602, 7
        %v604 = vsub.s32 3, %v603
        %v605 = vrot.slane %v398, %v604
        %v606 = vlaneseq
        %v607 = vshrl.u32 %v606, 7
        %v608 = vsub.s32 7, %v607
        %v609 = vrot.slane %v398, %v608
        %v610 = vlaneseq
        %v611 = vshrl.u32 %v610, 7
        %v612 = vsub.s32 3, %v611
        %v613 = vrot.slane %v399, %v612
        %v614 = vlaneseq
        %v615 = vshrl.u32 %v614, 7
        %v616 = vsub.s32 7, %v615
        %v617 = vrot.slane %v399, %v616
        %v622 = vlaneseq
        %v623 = vshrl.u32 %v622, 7
        %v624 = vsub.s32 3, %v623
        %v625 = vrot.slane %v605, %v624
        %v626 = vlaneseq
        %v627 = vshrl.u32 %v626, 7
        %v628 = vsub.s32 3, %v627
        %v629 = vrot.slane %v609, %v628
        %v630 = vlaneseq
        %v631 = vshrl.u32 %v630, 7
        %v632 = vsub.s32 3, %v631
        %v633 = vrot.slane %v613, %v632
        %v634 = vlaneseq
        %v635 = vshrl.u32 %v634, 7
        %v636 = vsub.s32 3, %v635
        %v637 = vrot.slane %v617, %v636
        %v638 = vmul.f32 %v600, %v625
        %v639 = vmul.f32 %v600, %v629
        %v640 = vmul.f32 %v600, %v633
        %v641 = vmul.f32 %v600, %v637
        %646 = vrot.lane.b32.xlu0 %v638, 127
        %v647 = vpop.permute.xlu0 %646
        %648 = vrot.lane.b32.xlu0 %v639, 127
        %v649 = vpop.permute.xlu0 %648
        %650 = vrot.lane.b32.xlu0 %v640, 127
        %v651 = vpop.permute.xlu0 %650
        %652 = vrot.lane.b32.xlu0 %v641, 127
        %v653 = vpop.permute.xlu0 %652
        %v654 = vsel %vm458, %v647, %v649
        %v655 = vsel %vm458, %v649, %v651
        %v656 = vsel %vm458, %v651, %v653
        %v660 = vadd.f32 %v595, %v654
        %v661 = vadd.f32 %v596, %v655
        %v662 = vadd.f32 %v597, %v656
        %663 = vset.pattern.permute.xlu0 2
        %664 = vperm.xlu0 %663, %v247
        %v665 = vpop.permute.xlu0 %664
        %v667 = vmul.f32 %v665, %v429
        %v668 = vmul.f32 %v665, %v433
        %v669 = vmul.f32 %v665, %v437
        %v670 = vmul.f32 %v665, %v441
        %675 = vrot.lane.b32.xlu0 %v667, 126
        %v676 = vpop.permute.xlu0 %675
        %677 = vrot.lane.b32.xlu0 %v668, 126
        %v678 = vpop.permute.xlu0 %677
        %679 = vrot.lane.b32.xlu0 %v669, 126
        %v680 = vpop.permute.xlu0 %679
        %681 = vrot.lane.b32.xlu0 %v670, 126
        %v682 = vpop.permute.xlu0 %681
        %vm683 = vcmask 1031168
        %v684 = vsel %vm683, %v676, %v678
        %v685 = vsel %vm683, %v678, %v680
        %v686 = vsel %vm683, %v680, %v682
        %v690 = vadd.f32 %v660, %v684
        %v691 = vadd.f32 %v661, %v685
        %v692 = vadd.f32 %v662, %v686
        %693 = vset.pattern.permute.xlu0 11
        %694 = vperm.xlu0 %693, %v247
        %v695 = vpop.permute.xlu0 %694
        %v697 = vmul.f32 %v695, %v495
        %v698 = vmul.f32 %v695, %v499
        %v699 = vmul.f32 %v695, %v503
        %v700 = vmul.f32 %v695, %v507
        %705 = vrot.lane.b32.xlu0 %v697, 126
        %v706 = vpop.permute.xlu0 %705
        %707 = vrot.lane.b32.xlu0 %v698, 126
        %v708 = vpop.permute.xlu0 %707
        %709 = vrot.lane.b32.xlu0 %v699, 126
        %v710 = vpop.permute.xlu0 %709
        %711 = vrot.lane.b32.xlu0 %v700, 126
        %v712 = vpop.permute.xlu0 %711
        %v713 = vsel %vm683, %v706, %v708
        %v714 = vsel %vm683, %v708, %v710
        %v715 = vsel %vm683, %v710, %v712
        %v719 = vadd.f32 %v690, %v713
        %v720 = vadd.f32 %v691, %v714
        %v721 = vadd.f32 %v692, %v715
        %722 = vset.pattern.permute.xlu0 20
        %723 = vperm.xlu0 %722, %v247
        %v724 = vpop.permute.xlu0 %723
        %v726 = vmul.f32 %v724, %v560
        %v727 = vmul.f32 %v724, %v564
        %v728 = vmul.f32 %v724, %v568
        %v729 = vmul.f32 %v724, %v572
        %734 = vrot.lane.b32.xlu0 %v726, 126
        %v735 = vpop.permute.xlu0 %734
        %736 = vrot.lane.b32.xlu0 %v727, 126
        %v737 = vpop.permute.xlu0 %736
        %738 = vrot.lane.b32.xlu0 %v728, 126
        %v739 = vpop.permute.xlu0 %738
        %740 = vrot.lane.b32.xlu0 %v729, 126
        %v741 = vpop.permute.xlu0 %740
        %v742 = vsel %vm683, %v735, %v737
        %v743 = vsel %vm683, %v737, %v739
        %v744 = vsel %vm683, %v739, %v741
        %v748 = vadd.f32 %v719, %v742
        %v749 = vadd.f32 %v720, %v743
        %v750 = vadd.f32 %v721, %v744
        %751 = vset.pattern.permute.xlu0 29
        %752 = vperm.xlu0 %751, %v247
        %v753 = vpop.permute.xlu0 %752
        %v755 = vmul.f32 %v753, %v625
        %v756 = vmul.f32 %v753, %v629
        %v757 = vmul.f32 %v753, %v633
        %v758 = vmul.f32 %v753, %v637
        %763 = vrot.lane.b32.xlu0 %v755, 126
        %v764 = vpop.permute.xlu0 %763
        %765 = vrot.lane.b32.xlu0 %v756, 126
        %v766 = vpop.permute.xlu0 %765
        %767 = vrot.lane.b32.xlu0 %v757, 126
        %v768 = vpop.permute.xlu0 %767
        %769 = vrot.lane.b32.xlu0 %v758, 126
        %v770 = vpop.permute.xlu0 %769
        %v771 = vsel %vm683, %v764, %v766
        %v772 = vsel %vm683, %v766, %v768
        %v773 = vsel %vm683, %v768, %v770
        %v777 = vadd.f32 %v748, %v771
        %v778 = vadd.f32 %v749, %v772
        %v779 = vadd.f32 %v750, %v773
        %780 = vset.pattern.permute.xlu0 3
        %781 = vperm.xlu0 %780, %v247
        %v782 = vpop.permute.xlu0 %781
        %v784 = vmul.f32 %v782, %v429
        %v785 = vmul.f32 %v782, %v433
        %v786 = vmul.f32 %v782, %v437
        %v787 = vmul.f32 %v782, %v441
        %792 = vrot.lane.b32.xlu0 %v784, 110
        %v793 = vpop.permute.xlu0 %792
        %794 = vrot.lane.b32.xlu0 %v785, 110
        %v795 = vpop.permute.xlu0 %794
        %796 = vrot.lane.b32.xlu0 %v786, 110
        %v797 = vpop.permute.xlu0 %796
        %798 = vrot.lane.b32.xlu0 %v787, 110
        %v799 = vpop.permute.xlu0 %798
        %vm800 = vcmask 900096
        %v801 = vsel %vm800, %v793, %v795
        %v802 = vsel %vm800, %v795, %v797
        %v803 = vsel %vm800, %v797, %v799
        %v807 = vadd.f32 %v777, %v801
        %v808 = vadd.f32 %v778, %v802
        %v809 = vadd.f32 %v779, %v803
        %810 = vset.pattern.permute.xlu0 12
        %811 = vperm.xlu0 %810, %v247
        %v812 = vpop.permute.xlu0 %811
        %v814 = vmul.f32 %v812, %v495
        %v815 = vmul.f32 %v812, %v499
        %v816 = vmul.f32 %v812, %v503
        %v817 = vmul.f32 %v812, %v507
        %822 = vrot.lane.b32.xlu0 %v814, 110
        %v823 = vpop.permute.xlu0 %822
        %824 = vrot.lane.b32.xlu0 %v815, 110
        %v825 = vpop.permute.xlu0 %824
        %826 = vrot.lane.b32.xlu0 %v816, 110
        %v827 = vpop.permute.xlu0 %826
        %828 = vrot.lane.b32.xlu0 %v817, 110
        %v829 = vpop.permute.xlu0 %828
        %v830 = vsel %vm800, %v823, %v825
        %v831 = vsel %vm800, %v825, %v827
        %v832 = vsel %vm800, %v827, %v829
        %v836 = vadd.f32 %v807, %v830
        %v837 = vadd.f32 %v808, %v831
        %v838 = vadd.f32 %v809, %v832
        %839 = vset.pattern.permute.xlu0 21
        %840 = vperm.xlu0 %839, %v247
        %v841 = vpop.permute.xlu0 %840
        %v843 = vmul.f32 %v841, %v560
        %v844 = vmul.f32 %v841, %v564
        %v845 = vmul.f32 %v841, %v568
        %v846 = vmul.f32 %v841, %v572
        %851 = vrot.lane.b32.xlu0 %v843, 110
        %v852 = vpop.permute.xlu0 %851
        %853 = vrot.lane.b32.xlu0 %v844, 110
        %v854 = vpop.permute.xlu0 %853
        %855 = vrot.lane.b32.xlu0 %v845, 110
        %v856 = vpop.permute.xlu0 %855
        %857 = vrot.lane.b32.xlu0 %v846, 110
        %v858 = vpop.permute.xlu0 %857
        %v859 = vsel %vm800, %v852, %v854
        %v860 = vsel %vm800, %v854, %v856
        %v861 = vsel %vm800, %v856, %v858
        %v865 = vadd.f32 %v836, %v859
        %v866 = vadd.f32 %v837, %v860
        %v867 = vadd.f32 %v838, %v861
        %868 = vset.pattern.permute.xlu0 30
        %869 = vperm.xlu0 %868, %v247
        %v870 = vpop.permute.xlu0 %869
        %v872 = vmul.f32 %v870, %v625
        %v873 = vmul.f32 %v870, %v629
        %v874 = vmul.f32 %v870, %v633
        %v875 = vmul.f32 %v870, %v637
        %880 = vrot.lane.b32.xlu0 %v872, 110
        %v881 = vpop.permute.xlu0 %880
        %882 = vrot.lane.b32.xlu0 %v873, 110
        %v883 = vpop.permute.xlu0 %882
        %884 = vrot.lane.b32.xlu0 %v874, 110
        %v885 = vpop.permute.xlu0 %884
        %886 = vrot.lane.b32.xlu0 %v875, 110
        %v887 = vpop.permute.xlu0 %886
        %v888 = vsel %vm800, %v881, %v883
        %v889 = vsel %vm800, %v883, %v885
        %v890 = vsel %vm800, %v885, %v887
        %v894 = vadd.f32 %v865, %v888
        %v895 = vadd.f32 %v866, %v889
        %v896 = vadd.f32 %v867, %v890
        %897 = vset.pattern.permute.xlu0 4
        %898 = vperm.xlu0 %897, %v247
        %v899 = vpop.permute.xlu0 %898
        %v901 = vmul.f32 %v899, %v429
        %v902 = vmul.f32 %v899, %v433
        %v903 = vmul.f32 %v899, %v437
        %v904 = vmul.f32 %v899, %v441
        %909 = vrot.lane.b32.xlu0 %v901, 109
        %v910 = vpop.permute.xlu0 %909
        %911 = vrot.lane.b32.xlu0 %v902, 109
        %v912 = vpop.permute.xlu0 %911
        %913 = vrot.lane.b32.xlu0 %v903, 109
        %v914 = vpop.permute.xlu0 %913
        %915 = vrot.lane.b32.xlu0 %v904, 109
        %v916 = vpop.permute.xlu0 %915
        %vm917 = vcmask 891904
        %v918 = vsel %vm917, %v910, %v912
        %v919 = vsel %vm917, %v912, %v914
        %v920 = vsel %vm917, %v914, %v916
        %v924 = vadd.f32 %v894, %v918
        %v925 = vadd.f32 %v895, %v919
        %v926 = vadd.f32 %v896, %v920
        %927 = vset.pattern.permute.xlu0 13
        %928 = vperm.xlu0 %927, %v247
        %v929 = vpop.permute.xlu0 %928
        %v931 = vmul.f32 %v929, %v495
        %v932 = vmul.f32 %v929, %v499
        %v933 = vmul.f32 %v929, %v503
        %v934 = vmul.f32 %v929, %v507
        %939 = vrot.lane.b32.xlu0 %v931, 109
        %v940 = vpop.permute.xlu0 %939
        %941 = vrot.lane.b32.xlu0 %v932, 109
        %v942 = vpop.permute.xlu0 %941
        %943 = vrot.lane.b32.xlu0 %v933, 109
        %v944 = vpop.permute.xlu0 %943
        %945 = vrot.lane.b32.xlu0 %v934, 109
        %v946 = vpop.permute.xlu0 %945
        %v947 = vsel %vm917, %v940, %v942
        %v948 = vsel %vm917, %v942, %v944
        %v949 = vsel %vm917, %v944, %v946
        %v953 = vadd.f32 %v924, %v947
        %v954 = vadd.f32 %v925, %v948
        %v955 = vadd.f32 %v926, %v949
        %956 = vset.pattern.permute.xlu0 22
        %957 = vperm.xlu0 %956, %v247
        %v958 = vpop.permute.xlu0 %957
        %v960 = vmul.f32 %v958, %v560
        %v961 = vmul.f32 %v958, %v564
        %v962 = vmul.f32 %v958, %v568
        %v963 = vmul.f32 %v958, %v572
        %968 = vrot.lane.b32.xlu0 %v960, 109
        %v969 = vpop.permute.xlu0 %968
        %970 = vrot.lane.b32.xlu0 %v961, 109
        %v971 = vpop.permute.xlu0 %970
        %972 = vrot.lane.b32.xlu0 %v962, 109
        %v973 = vpop.permute.xlu0 %972
        %974 = vrot.lane.b32.xlu0 %v963, 109
        %v975 = vpop.permute.xlu0 %974
        %v976 = vsel %vm917, %v969, %v971
        %v977 = vsel %vm917, %v971, %v973
        %v978 = vsel %vm917, %v973, %v975
        %v982 = vadd.f32 %v953, %v976
        %v983 = vadd.f32 %v954, %v977
        %v984 = vadd.f32 %v955, %v978
        %985 = vset.pattern.permute.xlu0 31
        %986 = vperm.xlu0 %985, %v247
        %v987 = vpop.permute.xlu0 %986
        %v989 = vmul.f32 %v987, %v625
        %v990 = vmul.f32 %v987, %v629
        %v991 = vmul.f32 %v987, %v633
        %v992 = vmul.f32 %v987, %v637
        %997 = vrot.lane.b32.xlu0 %v989, 109
        %v998 = vpop.permute.xlu0 %997
        %999 = vrot.lane.b32.xlu0 %v990, 109
        %v1000 = vpop.permute.xlu0 %999
        %1001 = vrot.lane.b32.xlu0 %v991, 109
        %v1002 = vpop.permute.xlu0 %1001
        %1003 = vrot.lane.b32.xlu0 %v992, 109
        %v1004 = vpop.permute.xlu0 %1003
        %v1005 = vsel %vm917, %v998, %v1000
        %v1006 = vsel %vm917, %v1000, %v1002
        %v1007 = vsel %vm917, %v1002, %v1004
        %v1011 = vadd.f32 %v982, %v1005
        %v1012 = vadd.f32 %v983, %v1006
        %v1013 = vadd.f32 %v984, %v1007
        %1014 = vset.pattern.permute.xlu0 5
        %1015 = vperm.xlu0 %1014, %v247
        %v1016 = vpop.permute.xlu0 %1015
        %v1018 = vmul.f32 %v1016, %v429
        %v1019 = vmul.f32 %v1016, %v433
        %v1020 = vmul.f32 %v1016, %v437
        %v1021 = vmul.f32 %v1016, %v441
        %1026 = vrot.lane.b32.xlu0 %v1018, 108
        %v1027 = vpop.permute.xlu0 %1026
        %1028 = vrot.lane.b32.xlu0 %v1019, 108
        %v1029 = vpop.permute.xlu0 %1028
        %1030 = vrot.lane.b32.xlu0 %v1020, 108
        %v1031 = vpop.permute.xlu0 %1030
        %1032 = vrot.lane.b32.xlu0 %v1021, 108
        %v1033 = vpop.permute.xlu0 %1032
        %vm1034 = vcmask 883712
        %v1035 = vsel %vm1034, %v1027, %v1029
        %v1036 = vsel %vm1034, %v1029, %v1031
        %v1037 = vsel %vm1034, %v1031, %v1033
        %v1041 = vadd.f32 %v1011, %v1035
        %v1042 = vadd.f32 %v1012, %v1036
        %v1043 = vadd.f32 %v1013, %v1037
        %1044 = vset.pattern.permute.xlu0 14
        %1045 = vperm.xlu0 %1044, %v247
        %v1046 = vpop.permute.xlu0 %1045
        %v1048 = vmul.f32 %v1046, %v495
        %v1049 = vmul.f32 %v1046, %v499
        %v1050 = vmul.f32 %v1046, %v503
        %v1051 = vmul.f32 %v1046, %v507
        %1056 = vrot.lane.b32.xlu0 %v1048, 108
        %v1057 = vpop.permute.xlu0 %1056
        %1058 = vrot.lane.b32.xlu0 %v1049, 108
        %v1059 = vpop.permute.xlu0 %1058
        %1060 = vrot.lane.b32.xlu0 %v1050, 108
        %v1061 = vpop.permute.xlu0 %1060
        %1062 = vrot.lane.b32.xlu0 %v1051, 108
        %v1063 = vpop.permute.xlu0 %1062
        %v1064 = vsel %vm1034, %v1057, %v1059
        %v1065 = vsel %vm1034, %v1059, %v1061
        %v1066 = vsel %vm1034, %v1061, %v1063
        %v1070 = vadd.f32 %v1041, %v1064
        %v1071 = vadd.f32 %v1042, %v1065
        %v1072 = vadd.f32 %v1043, %v1066
        %1073 = vset.pattern.permute.xlu0 23
        %1074 = vperm.xlu0 %1073, %v247
        %v1075 = vpop.permute.xlu0 %1074
        %v1077 = vmul.f32 %v1075, %v560
        %v1078 = vmul.f32 %v1075, %v564
        %v1079 = vmul.f32 %v1075, %v568
        %v1080 = vmul.f32 %v1075, %v572
        %1085 = vrot.lane.b32.xlu0 %v1077, 108
        %v1086 = vpop.permute.xlu0 %1085
        %1087 = vrot.lane.b32.xlu0 %v1078, 108
        %v1088 = vpop.permute.xlu0 %1087
        %1089 = vrot.lane.b32.xlu0 %v1079, 108
        %v1090 = vpop.permute.xlu0 %1089
        %1091 = vrot.lane.b32.xlu0 %v1080, 108
        %v1092 = vpop.permute.xlu0 %1091
        %v1093 = vsel %vm1034, %v1086, %v1088
        %v1094 = vsel %vm1034, %v1088, %v1090
        %v1095 = vsel %vm1034, %v1090, %v1092
        %v1099 = vadd.f32 %v1070, %v1093
        %v1100 = vadd.f32 %v1071, %v1094
        %v1101 = vadd.f32 %v1072, %v1095
        %1102 = vset.pattern.permute.xlu0 32
        %1103 = vperm.xlu0 %1102, %v247
        %v1104 = vpop.permute.xlu0 %1103
        %v1106 = vmul.f32 %v1104, %v625
        %v1107 = vmul.f32 %v1104, %v629
        %v1108 = vmul.f32 %v1104, %v633
        %v1109 = vmul.f32 %v1104, %v637
        %1114 = vrot.lane.b32.xlu0 %v1106, 108
        %v1115 = vpop.permute.xlu0 %1114
        %1116 = vrot.lane.b32.xlu0 %v1107, 108
        %v1117 = vpop.permute.xlu0 %1116
        %1118 = vrot.lane.b32.xlu0 %v1108, 108
        %v1119 = vpop.permute.xlu0 %1118
        %1120 = vrot.lane.b32.xlu0 %v1109, 108
        %v1121 = vpop.permute.xlu0 %1120
        %v1122 = vsel %vm1034, %v1115, %v1117
        %v1123 = vsel %vm1034, %v1117, %v1119
        %v1124 = vsel %vm1034, %v1119, %v1121
        %v1128 = vadd.f32 %v1099, %v1122
        %v1129 = vadd.f32 %v1100, %v1123
        %v1130 = vadd.f32 %v1101, %v1124
        %1131 = vset.pattern.permute.xlu0 6
        %1132 = vperm.xlu0 %1131, %v247
        %v1133 = vpop.permute.xlu0 %1132
        %v1135 = vmul.f32 %v1133, %v429
        %v1136 = vmul.f32 %v1133, %v433
        %v1137 = vmul.f32 %v1133, %v437
        %v1138 = vmul.f32 %v1133, %v441
        %1143 = vrot.lane.b32.xlu0 %v1135, 92
        %v1144 = vpop.permute.xlu0 %1143
        %1145 = vrot.lane.b32.xlu0 %v1136, 92
        %v1146 = vpop.permute.xlu0 %1145
        %1147 = vrot.lane.b32.xlu0 %v1137, 92
        %v1148 = vpop.permute.xlu0 %1147
        %1149 = vrot.lane.b32.xlu0 %v1138, 92
        %v1150 = vpop.permute.xlu0 %1149
        %vm1151 = vcmask 752640
        %v1152 = vsel %vm1151, %v1144, %v1146
        %v1153 = vsel %vm1151, %v1146, %v1148
        %v1154 = vsel %vm1151, %v1148, %v1150
        %v1158 = vadd.f32 %v1128, %v1152
        %v1159 = vadd.f32 %v1129, %v1153
        %v1160 = vadd.f32 %v1130, %v1154
        %1161 = vset.pattern.permute.xlu0 15
        %1162 = vperm.xlu0 %1161, %v247
        %v1163 = vpop.permute.xlu0 %1162
        %v1165 = vmul.f32 %v1163, %v495
        %v1166 = vmul.f32 %v1163, %v499
        %v1167 = vmul.f32 %v1163, %v503
        %v1168 = vmul.f32 %v1163, %v507
        %1173 = vrot.lane.b32.xlu0 %v1165, 92
        %v1174 = vpop.permute.xlu0 %1173
        %1175 = vrot.lane.b32.xlu0 %v1166, 92
        %v1176 = vpop.permute.xlu0 %1175
        %1177 = vrot.lane.b32.xlu0 %v1167, 92
        %v1178 = vpop.permute.xlu0 %1177
        %1179 = vrot.lane.b32.xlu0 %v1168, 92
        %v1180 = vpop.permute.xlu0 %1179
        %v1181 = vsel %vm1151, %v1174, %v1176
        %v1182 = vsel %vm1151, %v1176, %v1178
        %v1183 = vsel %vm1151, %v1178, %v1180
        %v1187 = vadd.f32 %v1158, %v1181
        %v1188 = vadd.f32 %v1159, %v1182
        %v1189 = vadd.f32 %v1160, %v1183
        %1190 = vset.pattern.permute.xlu0 24
        %1191 = vperm.xlu0 %1190, %v247
        %v1192 = vpop.permute.xlu0 %1191
        %v1194 = vmul.f32 %v1192, %v560
        %v1195 = vmul.f32 %v1192, %v564
        %v1196 = vmul.f32 %v1192, %v568
        %v1197 = vmul.f32 %v1192, %v572
        %1202 = vrot.lane.b32.xlu0 %v1194, 92
        %v1203 = vpop.permute.xlu0 %1202
        %1204 = vrot.lane.b32.xlu0 %v1195, 92
        %v1205 = vpop.permute.xlu0 %1204
        %1206 = vrot.lane.b32.xlu0 %v1196, 92
        %v1207 = vpop.permute.xlu0 %1206
        %1208 = vrot.lane.b32.xlu0 %v1197, 92
        %v1209 = vpop.permute.xlu0 %1208
        %v1210 = vsel %vm1151, %v1203, %v1205
        %v1211 = vsel %vm1151, %v1205, %v1207
        %v1212 = vsel %vm1151, %v1207, %v1209
        %v1216 = vadd.f32 %v1187, %v1210
        %v1217 = vadd.f32 %v1188, %v1211
        %v1218 = vadd.f32 %v1189, %v1212
        %1219 = vset.pattern.permute.xlu0 33
        %1220 = vperm.xlu0 %1219, %v247
        %v1221 = vpop.permute.xlu0 %1220
        %v1223 = vmul.f32 %v1221, %v625
        %v1224 = vmul.f32 %v1221, %v629
        %v1225 = vmul.f32 %v1221, %v633
        %v1226 = vmul.f32 %v1221, %v637
        %1231 = vrot.lane.b32.xlu0 %v1223, 92
        %v1232 = vpop.permute.xlu0 %1231
        %1233 = vrot.lane.b32.xlu0 %v1224, 92
        %v1234 = vpop.permute.xlu0 %1233
        %1235 = vrot.lane.b32.xlu0 %v1225, 92
        %v1236 = vpop.permute.xlu0 %1235
        %1237 = vrot.lane.b32.xlu0 %v1226, 92
        %v1238 = vpop.permute.xlu0 %1237
        %v1239 = vsel %vm1151, %v1232, %v1234
        %v1240 = vsel %vm1151, %v1234, %v1236
        %v1241 = vsel %vm1151, %v1236, %v1238
        %v1245 = vadd.f32 %v1216, %v1239
        %v1246 = vadd.f32 %v1217, %v1240
        %v1247 = vadd.f32 %v1218, %v1241
        %1248 = vset.pattern.permute.xlu0 7
        %1249 = vperm.xlu0 %1248, %v247
        %v1250 = vpop.permute.xlu0 %1249
        %v1252 = vmul.f32 %v1250, %v429
        %v1253 = vmul.f32 %v1250, %v433
        %v1254 = vmul.f32 %v1250, %v437
        %v1255 = vmul.f32 %v1250, %v441
        %1260 = vrot.lane.b32.xlu0 %v1252, 91
        %v1261 = vpop.permute.xlu0 %1260
        %1262 = vrot.lane.b32.xlu0 %v1253, 91
        %v1263 = vpop.permute.xlu0 %1262
        %1264 = vrot.lane.b32.xlu0 %v1254, 91
        %v1265 = vpop.permute.xlu0 %1264
        %1266 = vrot.lane.b32.xlu0 %v1255, 91
        %v1267 = vpop.permute.xlu0 %1266
        %vm1268 = vcmask 744448
        %v1269 = vsel %vm1268, %v1261, %v1263
        %v1270 = vsel %vm1268, %v1263, %v1265
        %v1271 = vsel %vm1268, %v1265, %v1267
        %v1275 = vadd.f32 %v1245, %v1269
        %v1276 = vadd.f32 %v1246, %v1270
        %v1277 = vadd.f32 %v1247, %v1271
        %1278 = vset.pattern.permute.xlu0 16
        %1279 = vperm.xlu0 %1278, %v247
        %v1280 = vpop.permute.xlu0 %1279
        %v1282 = vmul.f32 %v1280, %v495
        %v1283 = vmul.f32 %v1280, %v499
        %v1284 = vmul.f32 %v1280, %v503
        %v1285 = vmul.f32 %v1280, %v507
        %1290 = vrot.lane.b32.xlu0 %v1282, 91
        %v1291 = vpop.permute.xlu0 %1290
        %1292 = vrot.lane.b32.xlu0 %v1283, 91
        %v1293 = vpop.permute.xlu0 %1292
        %1294 = vrot.lane.b32.xlu0 %v1284, 91
        %v1295 = vpop.permute.xlu0 %1294
        %1296 = vrot.lane.b32.xlu0 %v1285, 91
        %v1297 = vpop.permute.xlu0 %1296
        %v1298 = vsel %vm1268, %v1291, %v1293
        %v1299 = vsel %vm1268, %v1293, %v1295
        %v1300 = vsel %vm1268, %v1295, %v1297
        %v1304 = vadd.f32 %v1275, %v1298
        %v1305 = vadd.f32 %v1276, %v1299
        %v1306 = vadd.f32 %v1277, %v1300
        %1307 = vset.pattern.permute.xlu0 25
        %1308 = vperm.xlu0 %1307, %v247
        %v1309 = vpop.permute.xlu0 %1308
        %v1311 = vmul.f32 %v1309, %v560
        %v1312 = vmul.f32 %v1309, %v564
        %v1313 = vmul.f32 %v1309, %v568
        %v1314 = vmul.f32 %v1309, %v572
        %1319 = vrot.lane.b32.xlu0 %v1311, 91
        %v1320 = vpop.permute.xlu0 %1319
        %1321 = vrot.lane.b32.xlu0 %v1312, 91
        %v1322 = vpop.permute.xlu0 %1321
        %1323 = vrot.lane.b32.xlu0 %v1313, 91
        %v1324 = vpop.permute.xlu0 %1323
        %1325 = vrot.lane.b32.xlu0 %v1314, 91
        %v1326 = vpop.permute.xlu0 %1325
        %v1327 = vsel %vm1268, %v1320, %v1322
        %v1328 = vsel %vm1268, %v1322, %v1324
        %v1329 = vsel %vm1268, %v1324, %v1326
        %v1333 = vadd.f32 %v1304, %v1327
        %v1334 = vadd.f32 %v1305, %v1328
        %v1335 = vadd.f32 %v1306, %v1329
        %1336 = vset.pattern.permute.xlu0 34
        %1337 = vperm.xlu0 %1336, %v247
        %v1338 = vpop.permute.xlu0 %1337
        %v1340 = vmul.f32 %v1338, %v625
        %v1341 = vmul.f32 %v1338, %v629
        %v1342 = vmul.f32 %v1338, %v633
        %v1343 = vmul.f32 %v1338, %v637
        %1348 = vrot.lane.b32.xlu0 %v1340, 91
        %v1349 = vpop.permute.xlu0 %1348
        %1350 = vrot.lane.b32.xlu0 %v1341, 91
        %v1351 = vpop.permute.xlu0 %1350
        %1352 = vrot.lane.b32.xlu0 %v1342, 91
        %v1353 = vpop.permute.xlu0 %1352
        %1354 = vrot.lane.b32.xlu0 %v1343, 91
        %v1355 = vpop.permute.xlu0 %1354
        %v1356 = vsel %vm1268, %v1349, %v1351
        %v1357 = vsel %vm1268, %v1351, %v1353
        %v1358 = vsel %vm1268, %v1353, %v1355
        %v1362 = vadd.f32 %v1333, %v1356
        %v1363 = vadd.f32 %v1334, %v1357
        %v1364 = vadd.f32 %v1335, %v1358
        %1365 = vset.pattern.permute.xlu0 8
        %1366 = vperm.xlu0 %1365, %v247
        %v1367 = vpop.permute.xlu0 %1366
        %v1369 = vmul.f32 %v1367, %v429
        %v1370 = vmul.f32 %v1367, %v433
        %v1371 = vmul.f32 %v1367, %v437
        %v1372 = vmul.f32 %v1367, %v441
        %1377 = vrot.lane.b32.xlu0 %v1369, 90
        %v1378 = vpop.permute.xlu0 %1377
        %1379 = vrot.lane.b32.xlu0 %v1370, 90
        %v1380 = vpop.permute.xlu0 %1379
        %1381 = vrot.lane.b32.xlu0 %v1371, 90
        %v1382 = vpop.permute.xlu0 %1381
        %1383 = vrot.lane.b32.xlu0 %v1372, 90
        %v1384 = vpop.permute.xlu0 %1383
        %vm1385 = vcmask 736256
        %v1386 = vsel %vm1385, %v1378, %v1380
        %v1387 = vsel %vm1385, %v1380, %v1382
        %v1388 = vsel %vm1385, %v1382, %v1384
        %v1392 = vadd.f32 %v1362, %v1386
        %v1393 = vadd.f32 %v1363, %v1387
        %v1394 = vadd.f32 %v1364, %v1388
        %1395 = vset.pattern.permute.xlu0 17
        %1396 = vperm.xlu0 %1395, %v247
        %v1397 = vpop.permute.xlu0 %1396
        %v1399 = vmul.f32 %v1397, %v495
        %v1400 = vmul.f32 %v1397, %v499
        %v1401 = vmul.f32 %v1397, %v503
        %v1402 = vmul.f32 %v1397, %v507
        %1407 = vrot.lane.b32.xlu0 %v1399, 90
        %v1408 = vpop.permute.xlu0 %1407
        %1409 = vrot.lane.b32.xlu0 %v1400, 90
        %v1410 = vpop.permute.xlu0 %1409
        %1411 = vrot.lane.b32.xlu0 %v1401, 90
        %v1412 = vpop.permute.xlu0 %1411
        %1413 = vrot.lane.b32.xlu0 %v1402, 90
        %v1414 = vpop.permute.xlu0 %1413
        %v1415 = vsel %vm1385, %v1408, %v1410
        %v1416 = vsel %vm1385, %v1410, %v1412
        %v1417 = vsel %vm1385, %v1412, %v1414
        %v1421 = vadd.f32 %v1392, %v1415
        %v1422 = vadd.f32 %v1393, %v1416
        %v1423 = vadd.f32 %v1394, %v1417
        %1424 = vset.pattern.permute.xlu0 26
        %1425 = vperm.xlu0 %1424, %v247
        %v1426 = vpop.permute.xlu0 %1425
        %v1428 = vmul.f32 %v1426, %v560
        %v1429 = vmul.f32 %v1426, %v564
        %v1430 = vmul.f32 %v1426, %v568
        %v1431 = vmul.f32 %v1426, %v572
        %1436 = vrot.lane.b32.xlu0 %v1428, 90
        %v1437 = vpop.permute.xlu0 %1436
        %1438 = vrot.lane.b32.xlu0 %v1429, 90
        %v1439 = vpop.permute.xlu0 %1438
        %1440 = vrot.lane.b32.xlu0 %v1430, 90
        %v1441 = vpop.permute.xlu0 %1440
        %1442 = vrot.lane.b32.xlu0 %v1431, 90
        %v1443 = vpop.permute.xlu0 %1442
        %v1444 = vsel %vm1385, %v1437, %v1439
        %v1445 = vsel %vm1385, %v1439, %v1441
        %v1446 = vsel %vm1385, %v1441, %v1443
        %v1450 = vadd.f32 %v1421, %v1444
        %v1451 = vadd.f32 %v1422, %v1445
        %v1452 = vadd.f32 %v1423, %v1446
        %1453 = vset.pattern.permute.xlu0 35
        %1454 = vperm.xlu0 %1453, %v247
        %v1455 = vpop.permute.xlu0 %1454
        %v1457 = vmul.f32 %v1455, %v625
        %v1458 = vmul.f32 %v1455, %v629
        %v1459 = vmul.f32 %v1455, %v633
        %v1460 = vmul.f32 %v1455, %v637
        %1465 = vrot.lane.b32.xlu0 %v1457, 90
        %v1466 = vpop.permute.xlu0 %1465
        %1467 = vrot.lane.b32.xlu0 %v1458, 90
        %v1468 = vpop.permute.xlu0 %1467
        %1469 = vrot.lane.b32.xlu0 %v1459, 90
        %v1470 = vpop.permute.xlu0 %1469
        %1471 = vrot.lane.b32.xlu0 %v1460, 90
        %v1472 = vpop.permute.xlu0 %1471
        %v1473 = vsel %vm1385, %v1466, %v1468
        %v1474 = vsel %vm1385, %v1468, %v1470
        %v1475 = vsel %vm1385, %v1470, %v1472
        %v1479 = vadd.f32 %v1450, %v1473
        %v1480 = vadd.f32 %v1451, %v1474
        %v1481 = vadd.f32 %v1452, %v1475
        %s1482 = smul.u32 %s21, 384
        %v1485 = vcombine.low %v1479, %v1480
        %s1487 = sshra.s32 %s1482, 7
        %s1488 = sand.u32 %s1482, 127
        %s1489 = smul.addr %s1487, 4
        %s1490 = scalar_lea.vmem [#allocation2], %s1489
        %1491 = vst [vmem:[%s1490] sm:$0xff] %v1485
        %1492 = vst [vmem:[%s1490 + $0x8] sm:$0xf] %v1481
        %v1493 = vld [vmem:[#allocation11] sm:$0x7]
        %v1495 = vlaneseq
        %v1496 = vshrl.u32 %v1495, 7
        %v1497 = vsub.s32 0, %v1496
        %v1498 = vrot.slane %v1493, %v1497
        %v1499 = vlaneseq
        %v1500 = vshrl.u32 %v1499, 7
        %v1501 = vsub.s32 1, %v1500
        %v1502 = vrot.slane %v1493, %v1501
        %v1503 = vlaneseq
        %v1504 = vshrl.u32 %v1503, 7
        %v1505 = vsub.s32 2, %v1504
        %v1506 = vrot.slane %v1493, %v1505
        %v1510 = vmul.f32 %v1479, %v1498
        %v1511 = vmul.f32 %v1480, %v1502
        %v1512 = vmul.f32 %v1481, %v1506
        %v1513 = vld [vmem:[#allocation3] sm:$0xf]
        %vm1514 = vcmask 1043456
        %v1515 = vsel %vm1514, %v1510, 0.0
        %v1516 = vsel %vm1514, %v1511, 0.0
        %v1517 = vadd.f32 %v1515, %v1516
        %v1518 = vsel %vm1514, %v1512, 0.0
        %v1519 = vadd.f32 %v1517, %v1518
        %1520 = vadd.xlane.f32.xlu0 %v1519
        %v1521 = vpop.xlane.xlu0 %1520
        %v1522 = vadd.f32 %v1513, %v1521
        %vm1523 = vcmask 3072
        %1524 = vst.msk [vmem:[#allocation3] sm:$0xf] %vm1523, %v1522
        %v1525 = vld [vmem:[#allocation4] sm:$0xf]
        %v1526 = vmul.f32 %v1510, %v1510
        %v1527 = vmul.f32 %v1511, %v1511
        %v1528 = vmul.f32 %v1512, %v1512
        %v1529 = vsel %vm1514, %v1526, 0.0
        %v1530 = vsel %vm1514, %v1527, 0.0
        %v1531 = vadd.f32 %v1529, %v1530
        %v1532 = vsel %vm1514, %v1528, 0.0
        %v1533 = vadd.f32 %v1531, %v1532
        %1534 = vadd.xlane.f32.xlu0 %v1533
        %v1535 = vpop.xlane.xlu0 %1534
        %v1536 = vadd.f32 %v1525, %v1535
        %1537 = vst.msk [vmem:[#allocation4] sm:$0xf] %vm1523, %v1536
        %p1538 = scmp.eq.s32.totalorder %s21, 1
        // Predicated region
        $region57: #{tpu_custom_call.1} parent=35 // pred_check
          %p1539 = pneg %p1538
        $region58: #{tpu_custom_call.1} parent=35 // pred_check_branch
          %1541 = sbr.rel (%p1539) target = $region60
        $region59: #{tpu_custom_call.1} parent=35 // pred_region
          %v1542 = vld [vmem:[#allocation10] sm:$0xf]
          %v1543 = vld [vmem:[#allocation11] sm:$0x3f]
          %v1544 = vld [vmem:[#allocation3] sm:$0xf]
          %v1545 = vmul.f32 %v1544, 0.001953125
          %v1546 = vld [vmem:[#allocation4] sm:$0xf]
          %v1547 = vmul.f32 %v1546, 0.001953125
          %v1548 = vmul.f32 %v1545, %v1545
          %v1549 = vsub.f32 %v1547, %v1548
          %v1550 = vadd.f32 %v1549, 1e-05
          %v1551 = vrsqrt.pop %v1550
          %v1552 = vmul.f32 %v1542, %v1551
          %v1553 = vmul.f32 %v1545, %v1552
          %1555 = vrot.lane.b32.xlu0 %v1553, 1
          %v1556 = vpop.permute.xlu0 %1555
          %v1558 = vsub.f32 %v1542, %v1556
          %v1559 = vld [vmem:[#allocation2] sm:$0xff]
          %v1560 = vld [vmem:[#allocation2 + $0x8] sm:$0xff]
          %v1561 = vld [vmem:[#allocation2 + $0x10] sm:$0xff]
          %1563 = vset.pattern.permute.xlu0 0
          %1564 = vperm.xlu0 %1563, %v1552
          %v1565 = vpop.permute.xlu0 %1564
          %v1567 = vunpack.c.l.s4 839922192
          %v1568 = vunpack.c.0.s8 %v1567
          %v1569 = vlaneseq
          %v1570 = vshrl.u32 %v1569, 7
          %v1571 = vsub.s32 %v1568, %v1570
          %v1572 = vrot.slane %v1565, %v1571
          %v1574 = vmul.f32 %v1559, %v1572
          %v1575 = vmul.f32 %v1560, %v1572
          %v1576 = vmul.f32 %v1561, %v1572
          %1578 = vset.pattern.permute.xlu0 1
          %1579 = vperm.xlu0 %1578, %v1558
          %v1580 = vpop.permute.xlu0 %1579
          %v1582 = vunpack.c.l.s4 839922192
          %v1583 = vunpack.c.0.s8 %v1582
          %v1584 = vlaneseq
          %v1585 = vshrl.u32 %v1584, 7
          %v1586 = vsub.s32 %v1583, %v1585
          %v1587 = vrot.slane %v1580, %v1586
          %v1589 = vadd.f32 %v1574, %v1587
          %v1590 = vadd.f32 %v1575, %v1587
          %v1591 = vadd.f32 %v1576, %v1587
          %v1592 = vmax.f32 %v1589, 0.0
          %v1593 = vmax.f32 %v1590, 0.0
          %v1594 = vmax.f32 %v1591, 0.0
          %v1596 = vlaneseq
          %v1597 = vshrl.u32 %v1596, 7
          %v1598 = vsub.s32 0, %v1597
          %v1599 = vrot.slane %v1543, %v1598
          %v1600 = vlaneseq
          %v1601 = vshrl.u32 %v1600, 7
          %v1602 = vsub.s32 1, %v1601
          %v1603 = vrot.slane %v1543, %v1602
          %v1604 = vlaneseq
          %v1605 = vshrl.u32 %v1604, 7
          %v1606 = vsub.s32 2, %v1605
          %v1607 = vrot.slane %v1543, %v1606
          %v1608 = vlaneseq
          %v1609 = vshrl.u32 %v1608, 7
          %v1610 = vsub.s32 3, %v1609
          %v1611 = vrot.slane %v1543, %v1610
          %v1612 = vlaneseq
          %v1613 = vshrl.u32 %v1612, 7
          %v1614 = vsub.s32 4, %v1613
          %v1615 = vrot.slane %v1543, %v1614
          %v1616 = vlaneseq
          %v1617 = vshrl.u32 %v1616, 7
          %v1618 = vsub.s32 5, %v1617
          %v1619 = vrot.slane %v1543, %v1618
          %v1620 = vcombine.low %v1599, %v1603
          %v1621 = vcombine.low %v1607, %v1611
          %v1622 = vcombine.low %v1615, %v1619
          %v1626 = vmul.f32 %v1592, %v1620
          %v1627 = vmul.f32 %v1593, %v1621
          %v1628 = vmul.f32 %v1594, %v1622
          %v1632 = vcombine.high %v1626, %v1626
          %v1633 = vcombine.high %v1627, %v1627
          %v1634 = vcombine.high %v1628, %v1628
          %v1638 = vsel %vm1514, %v1626, 0.0
          %v1639 = vsel %vm1514, %v1632, 0.0
          %v1640 = vadd.f32 %v1638, %v1639
          %v1641 = vsel %vm1514, %v1627, 0.0
          %v1642 = vadd.f32 %v1640, %v1641
          %v1643 = vsel %vm1514, %v1633, 0.0
          %v1644 = vadd.f32 %v1642, %v1643
          %v1645 = vsel %vm1514, %v1628, 0.0
          %v1646 = vadd.f32 %v1644, %v1645
          %v1647 = vsel %vm1514, %v1634, 0.0
          %v1648 = vadd.f32 %v1646, %v1647
          %1649 = vadd.xlane.f32.xlu0 %v1648
          %v1650 = vpop.xlane.xlu0 %1649
          %v1651 = vmul.f32 %v1650, 0.001953125
          %v1652 = vmul.f32 %v1626, %v1626
          %v1653 = vmul.f32 %v1627, %v1627
          %v1654 = vmul.f32 %v1628, %v1628
          %v1658 = vcombine.high %v1652, %v1652
          %v1659 = vcombine.high %v1653, %v1653
          %v1660 = vcombine.high %v1654, %v1654
          %v1664 = vsel %vm1514, %v1652, 0.0
          %v1665 = vsel %vm1514, %v1658, 0.0
          %v1666 = vadd.f32 %v1664, %v1665
          %v1667 = vsel %vm1514, %v1653, 0.0
          %v1668 = vadd.f32 %v1666, %v1667
          %v1669 = vsel %vm1514, %v1659, 0.0
          %v1670 = vadd.f32 %v1668, %v1669
          %v1671 = vsel %vm1514, %v1654, 0.0
          %v1672 = vadd.f32 %v1670, %v1671
          %v1673 = vsel %vm1514, %v1660, 0.0
          %v1674 = vadd.f32 %v1672, %v1673
          %1675 = vadd.xlane.f32.xlu0 %v1674
          %v1676 = vpop.xlane.xlu0 %1675
          %v1677 = vmul.f32 %v1676, 0.001953125
          %v1678 = vmul.f32 %v1651, %v1651
          %v1679 = vsub.f32 %v1677, %v1678
          %v1680 = vadd.f32 %v1679, 1e-05
          %v1681 = vrsqrt.pop %v1680
          %v1682 = vmul.f32 %v1542, %v1681
          %v1683 = vmul.f32 %v1651, %v1682
          %1685 = vrot.lane.b32.xlu0 %v1683, 1
          %v1686 = vpop.permute.xlu0 %1685
          %v1688 = vsub.f32 %v1542, %v1686
          %1690 = vset.pattern.permute.xlu0 2
          %1691 = vperm.xlu0 %1690, %v1682
          %v1692 = vpop.permute.xlu0 %1691
          %v1694 = vunpack.c.l.s4 839922192
          %v1695 = vunpack.c.0.s8 %v1694
          %v1696 = vlaneseq
          %v1697 = vshrl.u32 %v1696, 7
          %v1698 = vsub.s32 %v1695, %v1697
          %v1699 = vrot.slane %v1692, %v1698
          %v1701 = vmul.f32 %v1592, %v1699
          %v1702 = vmul.f32 %v1593, %v1699
          %v1703 = vmul.f32 %v1594, %v1699
          %1705 = vset.pattern.permute.xlu0 3
          %1706 = vperm.xlu0 %1705, %v1688
          %v1707 = vpop.permute.xlu0 %1706
          %v1709 = vunpack.c.l.s4 839922192
          %v1710 = vunpack.c.0.s8 %v1709
          %v1711 = vlaneseq
          %v1712 = vshrl.u32 %v1711, 7
          %v1713 = vsub.s32 %v1710, %v1712
          %v1714 = vrot.slane %v1707, %v1713
          %v1716 = vadd.f32 %v1701, %v1714
          %v1717 = vadd.f32 %v1702, %v1714
          %v1718 = vadd.f32 %v1703, %v1714
          %v1719 = vmax.f32 %v1716, 0.0
          %v1720 = vmax.f32 %v1717, 0.0
          %v1721 = vmax.f32 %v1718, 0.0
          %v1722 = vmul.f32 %v1719, %v1719
          %v1723 = vmul.f32 %v1720, %v1720
          %v1724 = vmul.f32 %v1721, %v1721
          %v1728 = vcombine.high %v1722, %v1722
          %v1729 = vcombine.high %v1723, %v1723
          %v1730 = vcombine.high %v1724, %v1724
          %v1734 = vsel %vm1514, %v1722, 0.0
          %v1735 = vrot.slane %v1734, 4
          %v1736 = vadd.f32 %v1734, %v1735
          %v1737 = vrot.slane %v1736, 2
          %v1738 = vadd.f32 %v1736, %v1737
          %v1739 = vrot.slane %v1738, 1
          %v1740 = vadd.f32 %v1738, %v1739
          %v1741 = vsel %vm1514, %v1728, 0.0
          %v1742 = vrot.slane %v1741, 4
          %v1743 = vadd.f32 %v1741, %v1742
          %v1744 = vrot.slane %v1743, 2
          %v1745 = vadd.f32 %v1743, %v1744
          %v1746 = vrot.slane %v1745, 1
          %v1747 = vadd.f32 %v1745, %v1746
          %v1748 = vsel %vm1514, %v1723, 0.0
          %v1749 = vrot.slane %v1748, 4
          %v1750 = vadd.f32 %v1748, %v1749
          %v1751 = vrot.slane %v1750, 2
          %v1752 = vadd.f32 %v1750, %v1751
          %v1753 = vrot.slane %v1752, 1
          %v1754 = vadd.f32 %v1752, %v1753
          %v1755 = vsel %vm1514, %v1729, 0.0
          %v1756 = vrot.slane %v1755, 4
          %v1757 = vadd.f32 %v1755, %v1756
          %v1758 = vrot.slane %v1757, 2
          %v1759 = vadd.f32 %v1757, %v1758
          %v1760 = vrot.slane %v1759, 1
          %v1761 = vadd.f32 %v1759, %v1760
          %v1762 = vsel %vm1514, %v1724, 0.0
          %v1763 = vrot.slane %v1762, 4
          %v1764 = vadd.f32 %v1762, %v1763
          %v1765 = vrot.slane %v1764, 2
          %v1766 = vadd.f32 %v1764, %v1765
          %v1767 = vrot.slane %v1766, 1
          %v1768 = vadd.f32 %v1766, %v1767
          %v1769 = vsel %vm1514, %v1730, 0.0
          %v1770 = vrot.slane %v1769, 4
          %v1771 = vadd.f32 %v1769, %v1770
          %v1772 = vrot.slane %v1771, 2
          %v1773 = vadd.f32 %v1771, %v1772
          %v1774 = vrot.slane %v1773, 1
          %v1775 = vadd.f32 %v1773, %v1774
          %v1776 = vmul.f32 %v1740, 0.5
          %v1777 = vmul.f32 %v1747, 0.5
          %v1778 = vmul.f32 %v1754, 0.5
          %v1779 = vmul.f32 %v1761, 0.5
          %v1780 = vmul.f32 %v1768, 0.5
          %v1781 = vmul.f32 %v1775, 0.5
          %v1782 = vadd.f32 %v1776, 1e-08
          %v1783 = vadd.f32 %v1777, 1e-08
          %v1784 = vadd.f32 %v1778, 1e-08
          %v1785 = vadd.f32 %v1779, 1e-08
          %v1786 = vadd.f32 %v1780, 1e-08
          %v1787 = vadd.f32 %v1781, 1e-08
          %v1788 = vlog2.pop %v1782
          %v1789 = vmul.f32 %v1788, 0.6931472
          %v1790 = vlog2.pop %v1783
          %v1791 = vmul.f32 %v1790, 0.6931472
          %v1792 = vlog2.pop %v1784
          %v1793 = vmul.f32 %v1792, 0.6931472
          %v1794 = vlog2.pop %v1785
          %v1795 = vmul.f32 %v1794, 0.6931472
          %v1796 = vlog2.pop %v1786
          %v1797 = vmul.f32 %v1796, 0.6931472
          %v1798 = vlog2.pop %v1787
          %v1799 = vmul.f32 %v1798, 0.6931472
          %v1800 = vsub.f32 %v1789, %v1776
          %v1801 = vsub.f32 %v1791, %v1777
          %v1802 = vsub.f32 %v1793, %v1778
          %v1803 = vsub.f32 %v1795, %v1779
          %v1804 = vsub.f32 %v1797, %v1780
          %v1805 = vsub.f32 %v1799, %v1781
          %v1806 = vrcp.pop %v1782
          %v1807 = vmul.f32 1.0, %v1806
          %v1808 = vrcp.pop %v1783
          %v1809 = vmul.f32 1.0, %v1808
          %v1810 = vrcp.pop %v1784
          %v1811 = vmul.f32 1.0, %v1810
          %v1812 = vrcp.pop %v1785
          %v1813 = vmul.f32 1.0, %v1812
          %v1814 = vrcp.pop %v1786
          %v1815 = vmul.f32 1.0, %v1814
          %v1816 = vrcp.pop %v1787
          %v1817 = vmul.f32 1.0, %v1816
          %v1818 = vadd.f32 %v1807, 1.0
          %v1819 = vadd.f32 %v1809, 1.0
          %v1820 = vadd.f32 %v1811, 1.0
          %v1821 = vadd.f32 %v1813, 1.0
          %v1822 = vadd.f32 %v1815, 1.0
          %v1823 = vadd.f32 %v1817, 1.0
          %v1824 = vmul.f32 %v1776, %v1776
          %v1825 = vmul.f32 %v1777, %v1777
          %v1826 = vmul.f32 %v1778, %v1778
          %v1827 = vmul.f32 %v1779, %v1779
          %v1828 = vmul.f32 %v1780, %v1780
          %v1829 = vmul.f32 %v1781, %v1781
          %v1830 = vadd.f32 %v1824, 1e-08
          %v1831 = vadd.f32 %v1825, 1e-08
          %v1832 = vadd.f32 %v1826, 1e-08
          %v1833 = vadd.f32 %v1827, 1e-08
          %v1834 = vadd.f32 %v1828, 1e-08
          %v1835 = vadd.f32 %v1829, 1e-08
          %v1836 = vrcp.pop %v1830
          %v1837 = vmul.f32 0.0, %v1836
          %v1838 = vrcp.pop %v1831
          %v1839 = vmul.f32 0.0, %v1838
          %v1840 = vrcp.pop %v1832
          %v1841 = vmul.f32 0.0, %v1840
          %v1842 = vrcp.pop %v1833
          %v1843 = vmul.f32 0.0, %v1842
          %v1844 = vrcp.pop %v1834
          %v1845 = vmul.f32 0.0, %v1844
          %v1846 = vrcp.pop %v1835
          %v1847 = vmul.f32 0.0, %v1846
          %v1848 = vadd.f32 %v1818, %v1837
          %v1849 = vadd.f32 %v1819, %v1839
          %v1850 = vadd.f32 %v1820, %v1841
          %v1851 = vadd.f32 %v1821, %v1843
          %v1852 = vadd.f32 %v1822, %v1845
          %v1853 = vadd.f32 %v1823, %v1847
          %v1854 = vlog2.pop %v1848
          %v1855 = vmul.f32 %v1854, 0.6931472
          %v1856 = vlog2.pop %v1849
          %v1857 = vmul.f32 %v1856, 0.6931472
          %v1858 = vlog2.pop %v1850
          %v1859 = vmul.f32 %v1858, 0.6931472
          %v1860 = vlog2.pop %v1851
          %v1861 = vmul.f32 %v1860, 0.6931472
          %v1862 = vlog2.pop %v1852
          %v1863 = vmul.f32 %v1862, 0.6931472
          %v1864 = vlog2.pop %v1853
          %v1865 = vmul.f32 %v1864, 0.6931472
          %v1866 = vadd.f32 %v1800, %v1855
          %v1867 = vadd.f32 %v1801, %v1857
          %v1868 = vadd.f32 %v1802, %v1859
          %v1869 = vadd.f32 %v1803, %v1861
          %v1870 = vadd.f32 %v1804, %v1863
          %v1871 = vadd.f32 %v1805, %v1865
          %v1872 = vsub.f32 -5.5451775, %v1866
          %v1873 = vsub.f32 -5.5451775, %v1867
          %v1874 = vsub.f32 -5.5451775, %v1868
          %v1875 = vsub.f32 -5.5451775, %v1869
          %v1876 = vsub.f32 -5.5451775, %v1870
          %v1877 = vsub.f32 -5.5451775, %v1871
          %v1878 = vmax.f32 %v1872, 0.0
          %v1879 = vmax.f32 %v1873, 0.0
          %v1880 = vmax.f32 %v1874, 0.0
          %v1881 = vmax.f32 %v1875, 0.0
          %v1882 = vmax.f32 %v1876, 0.0
          %v1883 = vmax.f32 %v1877, 0.0
          %v1890 = vcombine.low %v1878, %v1879
          %v1891 = vcombine.low %v1880, %v1881
          %v1892 = vcombine.low %v1882, %v1883
          %v1894 = vunpack.c.l.s4 1966171168
          %v1895 = vunpack.c.0.s8 %v1894
          %v1896 = vlaneseq
          %v1897 = vshrl.u32 %v1896, 7
          %v1898 = vsub.s32 %v1895, %v1897
          %v1899 = vrot.slane %v1890, %v1898
          %v1901 = vunpack.c.l.s4 1966171168
          %v1902 = vunpack.c.0.s8 %v1901
          %v1903 = vlaneseq
          %v1904 = vshrl.u32 %v1903, 7
          %v1905 = vsub.s32 %v1902, %v1904
          %v1906 = vrot.slane %v1891, %v1905
          %v1908 = vunpack.c.l.s4 1966171168
          %v1909 = vunpack.c.0.s8 %v1908
          %v1910 = vlaneseq
          %v1911 = vshrl.u32 %v1910, 7
          %v1912 = vsub.s32 %v1909, %v1911
          %v1913 = vrot.slane %v1892, %v1912
          %v1914 = vcombine.low %v1899, %v1906
          %v1916 = vunpack.c.l.s4 1966171168
          %v1917 = vunpack.c.0.s8 %v1916
          %v1918 = vlaneseq
          %v1919 = vshrl.u32 %v1918, 7
          %v1920 = vsub.s32 %v1917, %v1919
          %v1921 = vrot.slane %v1914, %v1920
          %v1923 = vunpack.c.l.s4 1966171168
          %v1924 = vunpack.c.0.s8 %v1923
          %v1925 = vlaneseq
          %v1926 = vshrl.u32 %v1925, 7
          %v1927 = vsub.s32 %v1924, %v1926
          %v1928 = vrot.slane %v1913, %v1927
          %v1929 = vcombine.low %v1921, %v1928
          %v1931 = vlaneseq
          %vm1932 = vcmp.ge.s32.totalorder %v1931, 0
          %vm1933 = vcmp.lt.s32.totalorder %v1931, 768
          %vm1934 = vmand %vm1932, %vm1933
          %1935 = vst.msk [vmem:[#allocation13] sm:$0x3f] %vm1934, %v1929
        $region60: #{tpu_custom_call.1} parent=35 // pred_fallthru
          _
        // Predicated region
        $region61: #{tpu_custom_call.1} parent=35 // pred_check
          %p1936 = pneg %p123
        $region62: #{tpu_custom_call.1} parent=35 // pred_check_branch
          %1938 = sbr.rel (%p1936) target = $region64
        $region63: #{tpu_custom_call.1} parent=35 // pred_region
          %s1940 = ssub.s32 96, 96
          %1941 = vsyncadd [#allocation7], %s1940
          %s1943 = sshll.u32 [#allocation13], 4
          %s1944 = int_to_ptr.vmem [resolvable:$true] %s1943
          %1946 = dma.vmem_to_hbm [thread:$0]  %s1944, 96, %s4, [#allocation7]
        $region64: #{tpu_custom_call.1} parent=35 // pred_fallthru
          _
        // Predicated region
        $region65: #{tpu_custom_call.1} parent=35 // pred_check
          %p1947 = pneg %p123
        $region66: #{tpu_custom_call.1} parent=35 // pred_check_branch
          %1949 = sbr.rel (%p1947) target = $region68
        $region67: #{tpu_custom_call.1} parent=35 // pred_region
          %1950 = dma.done [#allocation7], 96
        $region68: #{tpu_custom_call.1} parent=35 // pred_fallthru
          _
      $region36: #{tpu_custom_call.1} parent=5 // pred_fallthru
        _
      %p1951 = scmp.le.s32.totalorder 2, %s16
      // Predicated region
      $region69: #{tpu_custom_call.1} parent=5 // pred_check
        %p1952 = pneg %p1951
      $region70: #{tpu_custom_call.1} parent=5 // pred_check_branch
        %1954 = sbr.rel (%p1952) target = $region72
      $region71: #{tpu_custom_call.1} parent=5 // pred_region
        %s1955 = ssub.s32 %s16, 2
      $region72: #{tpu_custom_call.1} parent=5 // pred_fallthru
        _
    $region6: #{tpu_custom_call.1} parent=1 // loop_footer
      %s20 = sadd.s32 1, %s16
    $region7: #{tpu_custom_call.1} parent=1 // loop_footer_branch
      %15 = sbr.rel target = $region3
    $region8: #{tpu_custom_call.1} parent=1 // loop_exit
      _
    %1956 = vsyncpa [#allocation6], 1
    %s1957 = scalar_lea.sflag [#allocation6], 1
    %1958 = vsyncpa %s1957, 1
    %1959 = vsyncpa [#allocation9], 1
    %1960 = vsyncpa [#allocation12], 1
    %1961 = vsyncpa [#allocation7], 1
    %s1962 = scalar_lea.sflag [#allocation7], 1
    %1963 = vsyncpa %s1962, 1

</llo_original>
